<compile_context>
chip_gen: v6e
topology: v6e:2x2x1
jax: 0.10.0
libtpu: 0.0.40
codegen_flags: <defaults>
</compile_context>

<pallas_src>
import jax
import jax.numpy as jnp
from jax.experimental import pallas as pl
from jax.experimental.pallas import tpu as pltpu

LANE = 128
SUBLANE = 8


# ------------------------------ helpers ------------------------------------ #

def _round_up(v, m):
    return (v + m - 1) // m * m


def _default_vmem_limit():
    """Generation-aware VMEM budget: ~75% of physical, capped at 100 MiB."""
    try:
        cap = pltpu.get_tpu_info().vmem_capacity_bytes
    except Exception:
        cap = 64 * 1024 * 1024              # conservative (v7x-sized) fallback
    return int(min(cap * 3 // 4, 100 * 1024 * 1024))


def _maybe_resident_spec(shape, index_map, resident):
    # Constant-index blocks need no double buffering; Buffered(1) halves the
    # VMEM reserved for them (matters most under v7x's 64 MiB VMEM).
    if resident:
        return pl.BlockSpec(shape, index_map, pipeline_mode=pl.Buffered(1))
    return pl.BlockSpec(shape, index_map)


# ----------------------------- Pallas kernel ------------------------------- #

def fused_aug_mlp_kernel(x_ref, scale_ref, shift_ref,
                         w1_ref, b1_ref, w2_ref, b2_ref,
                         gx_ref, out_ref, acc_ref):
    """One (row_block, k_block) grid step: aug + partial first matmul; the
    bias/ReLU/classifier epilogue runs on the last k block."""
    k = pl.program_id(1)

    @pl.when(k == 0)
    def _init():
        acc_ref[...] = jnp.zeros_like(acc_ref)

    # aug: per-column affine; scale/shift are lane-dense (1, tk) rows broadcast
    # over the sublane (row) axis by the VPU.
    gx = x_ref[...] * scale_ref[...] + shift_ref[...]
    gx_ref[...] = gx.astype(gx_ref.dtype)

    # model, stage 1: partial D-contraction on the MXU, f32 VMEM accumulation.
    acc_ref[...] += jnp.dot(gx, w1_ref[...], preferred_element_type=jnp.float32)

    # model, stage 2: epilogue on the last k block only.
    @pl.when(k == pl.num_programs(1) - 1)
    def _finalize():
        h = jnp.maximum(acc_ref[...] + b1_ref[...], 0.0)
        out_ref[...] = (
            jnp.dot(h, w2_ref[...], preferred_element_type=jnp.float32) + b2_ref[...]
        ).astype(out_ref.dtype)


# --------------------------- one-time param prep --------------------------- #

def prepare_params(params, C, H, W, *, vmem_limit_bytes=None):
    """Init-time layout prep: pad weights to lane-dense shapes and expand the
    per-channel affine into lane-dense (1, Dp) broadcast rows.  Doing this per
    forward call would add an extra D*Hp HBM read+write each step."""
    HW = H * W
    D = C * HW
    Hid = params["w1"].shape[1]
    K = params["w2"].shape[1]

    if vmem_limit_bytes is None:
        vmem_limit_bytes = _default_vmem_limit()

    # Lane-dense (128-multiple) padded dims -> unmasked MXU operands / stores.
    Hp = _round_up(Hid, LANE)
    Kp = _round_up(K, LANE)
    Dp = _round_up(D, LANE)

    # D-contraction tile: keep each (tk, Hp) w1 block within ~1/6 of the VMEM
    # budget so the streamed row tiles still fit (critical on v7x).
    w1_budget = max(LANE * Hp * 4, vmem_limit_bytes // 6)
    if Dp * Hp * 4 <= w1_budget:
        tk = Dp                                   # w1 fully VMEM-resident
    else:
        tk = max(LANE, (w1_budget // (Hp * 4)) // LANE * LANE)
        Dp = _round_up(Dp, tk)                    # no partial k blocks in the reduction

    f32 = jnp.float32
    # Column d of the flattened image belongs to channel d // (H*W).
    scale_row = jnp.pad(jnp.repeat(params["aug_scale"].astype(f32), HW), (0, Dp - D))
    shift_row = jnp.pad(jnp.repeat(params["aug_shift"].astype(f32), HW), (0, Dp - D))

    # Zero padding keeps padded hidden/class units exactly zero through
    # bias + ReLU, so they never leak into the real logits.
    w1p = jnp.pad(params["w1"].astype(f32), ((0, Dp - D), (0, Hp - Hid)))
    b1p = jnp.pad(params["b1"].astype(f32), (0, Hp - Hid)).reshape(1, Hp)
    w2p = jnp.pad(params["w2"].astype(f32), ((0, Hp - Hid), (0, Kp - K)))
    b2p = jnp.pad(params["b2"].astype(f32), (0, Kp - K)).reshape(1, Kp)

    return dict(
        scale_row=scale_row.reshape(1, Dp), shift_row=shift_row.reshape(1, Dp),
        w1=w1p, b1=b1p, w2=w2p, b2=b2p,
        C=C, H=H, W=W, D=D, Dp=Dp, tk=tk, Hid=Hid, Hp=Hp, K=K, Kp=Kp,
        vmem_limit_bytes=vmem_limit_bytes,
    )


# -------------------------------- forward ---------------------------------- #

def aug_averaged_model_forward(x, y, prep, *, row_tile=512,
                               single_buffer_weights=True):
    """Training-mode forward: gx, gy = aug(x, y); return (gx, model(gx), gy)."""
    N, C, H, W = x.shape
    assert (C, H, W) == (prep["C"], prep["H"], prep["W"])
    D, Dp, tk = prep["D"], prep["Dp"], prep["tk"]
    Hp, Kp, K = prep["Hp"], prep["Kp"], prep["K"]
    vmem_limit = prep["vmem_limit_bytes"]

    x2d = x.reshape(N, D)
    if Dp != D:                       # lane-pad the feature axis with zeros
        x2d = jnp.pad(x2d, ((0, 0), (0, Dp - D)))

    # Row (batch) tiling: multiples of 8 sublanes, capped so the streamed x/gx
    # double buffers (~4 * tn * tk * 4 B) use <= ~1/3 of the VMEM budget, and
    # split so the row grid has >= 2 blocks when N allows (both v7x TCs busy).
    # Trailing partial row tiles read Pallas-padded rows past N; those results
    # land only in discarded output rows (rows are independent — do NOT add
    # cross-row reductions here without masking).
    tn_cap = max(SUBLANE, (vmem_limit // (48 * tk)) // SUBLANE * SUBLANE)
    if N <= 2 * SUBLANE:
        tn = N                        # full-extent block (only legal non-8-multiple)
    else:
        tn = min(_round_up(row_tile, SUBLANE),
                 _round_up(pl.cdiv(N, 2), SUBLANE),
                 tn_cap)

    nk = Dp // tk
    grid = (pl.cdiv(N, tn), nk)

    res_all = single_buffer_weights               # constant across both grid axes
    res_k = single_buffer_weights and nk == 1     # constant only if no k tiling

    in_specs = [
        pl.BlockSpec((tn, tk), lambda i, k: (i, k)),                    # x (streamed)
        _maybe_resident_spec((1, tk), lambda i, k: (0, k), res_k),      # scale row
        _maybe_resident_spec((1, tk), lambda i, k: (0, k), res_k),      # shift row
        _maybe_resident_spec((tk, Hp), lambda i, k: (k, 0), res_k),     # w1
        _maybe_resident_spec((1, Hp), lambda i, k: (0, 0), res_all),    # b1
        _maybe_resident_spec((Hp, Kp), lambda i, k: (0, 0), res_all),   # w2
        _maybe_resident_spec((1, Kp), lambda i, k: (0, 0), res_all),    # b2
    ]
    out_specs = (
        pl.BlockSpec((tn, tk), lambda i, k: (i, k)),                    # gx rows
        pl.BlockSpec((tn, Kp), lambda i, k: (i, 0)),                    # logits (resident over k)
    )

    cost = pl.CostEstimate(
        flops=2 * N * Dp + 2 * N * Dp * Hp + 2 * N * Hp * Kp,
        transcendentals=0,
        bytes_accessed=4 * (2 * N * Dp + 2 * Dp + Dp * Hp + Hp + Hp * Kp + Kp + N * Kp),
    )

    gx2d, logits_p = pl.pallas_call(
        fused_aug_mlp_kernel,
        out_shape=(
            jax.ShapeDtypeStruct((N, Dp), x.dtype),        # gx (lane-padded)
            jax.ShapeDtypeStruct((N, Kp), jnp.float32),    # logits (lane-padded)
        ),
        grid=grid,
        in_specs=in_specs,
        out_specs=out_specs,
        scratch_shapes=[pltpu.VMEM((tn, Hp), jnp.float32)],   # hidden-layer accumulator
        compiler_params=pltpu.CompilerParams(
            dimension_semantics=("parallel", "arbitrary"),     # rows across cores, D reduction serial
            vmem_limit_bytes=vmem_limit,
        ),
        cost_estimate=cost,
    )(x2d, prep["scale_row"], prep["shift_row"],
      prep["w1"], prep["b1"], prep["w2"], prep["b2"])

    gx = gx2d[:, :D].reshape(N, C, H, W)
    logits = logits_p[:, :K]
    gy = y  # Augerino-style augmentation leaves labels untouched
    # TODO(synk): eval-mode branch of the PyTorch module raises NotImplementedError,
    # so only the training branch (single augmentation copy) is implemented.
    return gx, logits, gy


# ---------------------------------- main ----------------------------------- #

if __name__ == "__main__":
    N, C, H, W = 2, 4, 16, 16
    HIDDEN, NUM_CLASSES = 32, 10
    D = C * H * W

    key = jax.random.PRNGKey(0)
    kx, ky, k1, k2 = jax.random.split(key, 4)

    x = jax.random.normal(kx, (N, C, H, W), dtype=jnp.float32)
    y = jax.random.randint(ky, (N,), 0, NUM_CLASSES, dtype=jnp.int32)

    # Deterministic synthetic parameters.
    params = {
        "aug_scale": 1.0 + 0.1 * jnp.arange(C, dtype=jnp.float32),
        "aug_shift": 0.01 * jnp.arange(C, dtype=jnp.float32),
        "w1": 0.02 * jax.random.normal(k1, (D, HIDDEN), dtype=jnp.float32),
        "b1": jnp.zeros((HIDDEN,), dtype=jnp.float32),
        "w2": 0.02 * jax.random.normal(k2, (HIDDEN, NUM_CLASSES), dtype=jnp.float32),
        "b2": jnp.zeros((NUM_CLASSES,), dtype=jnp.float32),
    }

    prep = prepare_params(params, C, H, W)    # one-time padding / layout prep

    try:
        gx, logits, gy = aug_averaged_model_forward(x, y, prep)
    except Exception:
        # Fallback for jax/Mosaic builds that reject pl.Buffered(1) single
        # buffering on the constant-index weight blocks.
        gx, logits, gy = aug_averaged_model_forward(
            x, y, prep, single_buffer_weights=False)
    jax.block_until_ready((gx, logits, gy))

    # Pure-JAX reference check.
    gx_ref = (x * params["aug_scale"].reshape(1, C, 1, 1)
              + params["aug_shift"].reshape(1, C, 1, 1))
    h_ref = jnp.maximum(gx_ref.reshape(N, D) @ params["w1"] + params["b1"], 0.0)
    logits_ref = h_ref @ params["w2"] + params["b2"]

    assert gx.shape == (N, C, H, W)
    assert logits.shape == (N, NUM_CLASSES)
    assert gy.shape == (N,)
    assert jnp.allclose(gx, gx_ref, atol=1e-5)
    assert jnp.allclose(logits, logits_ref, atol=1e-4)
    assert jnp.array_equal(gy, y)

    print("KERNEL_OK")
</pallas_src>

<mosaic_0001>
module attributes {stable_mosaic.version = 11 : i64} {
  func.func @fused_aug_mlp_kernel(%arg0: i32, %arg1: i32, %arg2: memref<2x1024xf32, #tpu.memory_space<vmem>>, %arg3: memref<1x1024xf32, #tpu.memory_space<vmem>>, %arg4: memref<1x1024xf32, #tpu.memory_space<vmem>>, %arg5: memref<1024x128xf32, #tpu.memory_space<vmem>>, %arg6: memref<1x128xf32, #tpu.memory_space<vmem>>, %arg7: memref<128x128xf32, #tpu.memory_space<vmem>>, %arg8: memref<1x128xf32, #tpu.memory_space<vmem>>, %arg9: memref<2x1024xf32, #tpu.memory_space<vmem>>, %arg10: memref<2x128xf32, #tpu.memory_space<vmem>>, %arg11: memref<2x128xf32, #tpu.memory_space<vmem>>) attributes {dimension_semantics = [#tpu.dimension_semantics<parallel>, #tpu.dimension_semantics<arbitrary>], iteration_bounds = array<i64: 1, 1>, scalar_prefetch = 0 : i64, scratch_operands = 1 : i64, tpu.core_type = #tpu.core_type<tc>, window_params = [{transform_indices = @transform_0, window_bounds = array<i64: 2, 1024>}, {pipeline_mode = #tpu.pipeline_mode<synchronous>, transform_indices = @transform_1, window_bounds = array<i64: 1, 1024>}, {pipeline_mode = #tpu.pipeline_mode<synchronous>, transform_indices = @transform_2, window_bounds = array<i64: 1, 1024>}, {pipeline_mode = #tpu.pipeline_mode<synchronous>, transform_indices = @transform_3, window_bounds = array<i64: 1024, 128>}, {pipeline_mode = #tpu.pipeline_mode<synchronous>, transform_indices = @transform_4, window_bounds = array<i64: 1, 128>}, {pipeline_mode = #tpu.pipeline_mode<synchronous>, transform_indices = @transform_5, window_bounds = array<i64: 128, 128>}, {pipeline_mode = #tpu.pipeline_mode<synchronous>, transform_indices = @transform_6, window_bounds = array<i64: 1, 128>}, {transform_indices = @transform_7, window_bounds = array<i64: 2, 1024>}, {transform_indices = @transform_8, window_bounds = array<i64: 2, 128>}]} {
    %c0_i32 = arith.constant 0 : i32
    %0 = arith.cmpi eq, %arg1, %c0_i32 : i32
    %1 = arith.extui %0 : i1 to i32
    %c0_i32_0 = arith.constant 0 : i32
    %2 = arith.cmpi ne, %1, %c0_i32_0 : i32
    scf.if %2 {
      %cst_16 = arith.constant 0.000000e+00 : f32
      %19 = vector.broadcast %cst_16 : f32 to vector<2x128xf32>
      %c0_17 = arith.constant 0 : index
      %c0_18 = arith.constant 0 : index
      %20 = vector.load %arg11[%c0_17, %c0_18] : memref<2x128xf32, #tpu.memory_space<vmem>>, vector<2x128xf32>
      tpu.vector_store %arg11[%c0_17, %c0_18], %19 {strides = array<i32>} : memref<2x128xf32, #tpu.memory_space<vmem>>, vector<2x128xf32>,
    } else {
    }
    %c0 = arith.constant 0 : index
    %c0_1 = arith.constant 0 : index
    %3 = vector.load %arg2[%c0, %c0_1] : memref<2x1024xf32, #tpu.memory_space<vmem>>, vector<2x1024xf32>
    %c0_2 = arith.constant 0 : index
    %c0_3 = arith.constant 0 : index
    %4 = vector.load %arg3[%c0_2, %c0_3] : memref<1x1024xf32, #tpu.memory_space<vmem>>, vector<1x1024xf32>
    %5 = vector.broadcast %4 : vector<1x1024xf32> to vector<2x1024xf32>
    %6 = arith.mulf %3, %5 : vector<2x1024xf32>
    %c0_4 = arith.constant 0 : index
    %c0_5 = arith.constant 0 : index
    %7 = vector.load %arg4[%c0_4, %c0_5] : memref<1x1024xf32, #tpu.memory_space<vmem>>, vector<1x1024xf32>
    %8 = vector.broadcast %7 : vector<1x1024xf32> to vector<2x1024xf32>
    %9 = arith.addf %6, %8 : vector<2x1024xf32>
    %c0_6 = arith.constant 0 : index
    %c0_7 = arith.constant 0 : index
    %10 = vector.load %arg9[%c0_6, %c0_7] : memref<2x1024xf32, #tpu.memory_space<vmem>>, vector<2x1024xf32>
    tpu.vector_store %arg9[%c0_6, %c0_7], %9 {strides = array<i32>} : memref<2x1024xf32, #tpu.memory_space<vmem>>, vector<2x1024xf32>,
    %c0_8 = arith.constant 0 : index
    %c0_9 = arith.constant 0 : index
    %11 = vector.load %arg11[%c0_8, %c0_9] : memref<2x128xf32, #tpu.memory_space<vmem>>, vector<2x128xf32>
    %c0_10 = arith.constant 0 : index
    %c0_11 = arith.constant 0 : index
    %12 = vector.load %arg5[%c0_10, %c0_11] : memref<1024x128xf32, #tpu.memory_space<vmem>>, vector<1024x128xf32>
    %cst = arith.constant dense<0.000000e+00> : vector<2x128xf32>
    %13 = tpu.matmul %9, %12, %cst {dimension_numbers = #tpu.dot_dimension_numbers<[1], [0], [0], [1], [0, 0, 1, 1], [], []>} : vector<2x1024xf32>, vector<1024x128xf32>, vector<2x128xf32> -> vector<2x128xf32>
    %14 = arith.addf %11, %13 : vector<2x128xf32>
    %c0_12 = arith.constant 0 : index
    %c0_13 = arith.constant 0 : index
    %15 = vector.load %arg11[%c0_12, %c0_13] : memref<2x128xf32, #tpu.memory_space<vmem>>, vector<2x128xf32>
    tpu.vector_store %arg11[%c0_12, %c0_13], %14 {strides = array<i32>} : memref<2x128xf32, #tpu.memory_space<vmem>>, vector<2x128xf32>,
    %c0_i32_14 = arith.constant 0 : i32
    %16 = arith.cmpi eq, %arg1, %c0_i32_14 : i32
    %17 = arith.extui %16 : i1 to i32
    %c0_i32_15 = arith.constant 0 : i32
    %18 = arith.cmpi ne, %17, %c0_i32_15 : i32
    scf.if %18 {
      %c0_16 = arith.constant 0 : index
      %c0_17 = arith.constant 0 : index
      %19 = vector.load %arg11[%c0_16, %c0_17] : memref<2x128xf32, #tpu.memory_space<vmem>>, vector<2x128xf32>
      %c0_18 = arith.constant 0 : index
      %c0_19 = arith.constant 0 : index
      %20 = vector.load %arg6[%c0_18, %c0_19] : memref<1x128xf32, #tpu.memory_space<vmem>>, vector<1x128xf32>
      %21 = vector.broadcast %20 : vector<1x128xf32> to vector<2x128xf32>
      %22 = arith.addf %19, %21 : vector<2x128xf32>
      %cst_20 = arith.constant 0.000000e+00 : f32
      %23 = vector.broadcast %cst_20 : f32 to vector<2x128xf32>
      %24 = arith.maximumf %22, %23 : vector<2x128xf32>
      %c0_21 = arith.constant 0 : index
      %c0_22 = arith.constant 0 : index
      %25 = vector.load %arg7[%c0_21, %c0_22] : memref<128x128xf32, #tpu.memory_space<vmem>>, vector<128x128xf32>
      %cst_23 = arith.constant dense<0.000000e+00> : vector<2x128xf32>
      %26 = tpu.matmul %24, %25, %cst_23 {dimension_numbers = #tpu.dot_dimension_numbers<[1], [0], [0], [1], [0, 0, 1, 1], [], []>} : vector<2x128xf32>, vector<128x128xf32>, vector<2x128xf32> -> vector<2x128xf32>
      %c0_24 = arith.constant 0 : index
      %c0_25 = arith.constant 0 : index
      %27 = vector.load %arg8[%c0_24, %c0_25] : memref<1x128xf32, #tpu.memory_space<vmem>>, vector<1x128xf32>
      %28 = vector.broadcast %27 : vector<1x128xf32> to vector<2x128xf32>
      %29 = arith.addf %26, %28 : vector<2x128xf32>
      %c0_26 = arith.constant 0 : index
      %c0_27 = arith.constant 0 : index
      %30 = vector.load %arg10[%c0_26, %c0_27] : memref<2x128xf32, #tpu.memory_space<vmem>>, vector<2x128xf32>
      tpu.vector_store %arg10[%c0_26, %c0_27], %29 {strides = array<i32>} : memref<2x128xf32, #tpu.memory_space<vmem>>, vector<2x128xf32>,
    } else {
    }
    return
  }
  func.func @transform_0(%arg0: i32, %arg1: i32) -> (i32, i32) {
    %c0_i32 = arith.constant 0 : i32
    return %arg0, %arg1 : i32, i32
  }
  func.func @transform_1(%arg0: i32, %arg1: i32) -> (i32, i32) {
    %c0_i32 = arith.constant 0 : i32
    %c0_i32_0 = arith.constant 0 : i32
    return %c0_i32, %arg1 : i32, i32
  }
  func.func @transform_2(%arg0: i32, %arg1: i32) -> (i32, i32) {
    %c0_i32 = arith.constant 0 : i32
    %c0_i32_0 = arith.constant 0 : i32
    return %c0_i32, %arg1 : i32, i32
  }
  func.func @transform_3(%arg0: i32, %arg1: i32) -> (i32, i32) {
    %c0_i32 = arith.constant 0 : i32
    %c0_i32_0 = arith.constant 0 : i32
    return %arg1, %c0_i32 : i32, i32
  }
  func.func @transform_4(%arg0: i32, %arg1: i32) -> (i32, i32) {
    %c0_i32 = arith.constant 0 : i32
    %c0_i32_0 = arith.constant 0 : i32
    %c0_i32_1 = arith.constant 0 : i32
    return %c0_i32, %c0_i32_0 : i32, i32
  }
  func.func @transform_5(%arg0: i32, %arg1: i32) -> (i32, i32) {
    %c0_i32 = arith.constant 0 : i32
    %c0_i32_0 = arith.constant 0 : i32
    %c0_i32_1 = arith.constant 0 : i32
    return %c0_i32, %c0_i32_0 : i32, i32
  }
  func.func @transform_6(%arg0: i32, %arg1: i32) -> (i32, i32) {
    %c0_i32 = arith.constant 0 : i32
    %c0_i32_0 = arith.constant 0 : i32
    %c0_i32_1 = arith.constant 0 : i32
    return %c0_i32, %c0_i32_0 : i32, i32
  }
  func.func @transform_7(%arg0: i32, %arg1: i32) -> (i32, i32) {
    %c0_i32 = arith.constant 0 : i32
    return %arg0, %arg1 : i32, i32
  }
  func.func @transform_8(%arg0: i32, %arg1: i32) -> (i32, i32) {
    %c0_i32 = arith.constant 0 : i32
    %c0_i32_0 = arith.constant 0 : i32
    return %arg0, %c0_i32 : i32, i32
  }
}

module attributes {stable_mosaic.version = 11 : i64} {
  func.func @fused_aug_mlp_kernel(%arg0: i32, %arg1: i32, %arg2: memref<2x1024xf32, #tpu.memory_space<vmem>>, %arg3: memref<1x1024xf32, #tpu.memory_space<vmem>>, %arg4: memref<1x1024xf32, #tpu.memory_space<vmem>>, %arg5: memref<1024x128xf32, #tpu.memory_space<vmem>>, %arg6: memref<1x128xf32, #tpu.memory_space<vmem>>, %arg7: memref<128x128xf32, #tpu.memory_space<vmem>>, %arg8: memref<1x128xf32, #tpu.memory_space<vmem>>, %arg9: memref<2x1024xf32, #tpu.memory_space<vmem>>, %arg10: memref<2x128xf32, #tpu.memory_space<vmem>>, %arg11: memref<2x128xf32, #tpu.memory_space<vmem>>) attributes {dimension_semantics = [#tpu.dimension_semantics<parallel>, #tpu.dimension_semantics<arbitrary>], iteration_bounds = array<i64: 1, 1>, scalar_prefetch = 0 : i64, scratch_operands = 1 : i64, tpu.core_type = #tpu.core_type<tc>, window_params = [{transform_indices = @transform_0, window_bounds = array<i64: 2, 1024>}, {transform_indices = @transform_1, window_bounds = array<i64: 1, 1024>}, {transform_indices = @transform_2, window_bounds = array<i64: 1, 1024>}, {transform_indices = @transform_3, window_bounds = array<i64: 1024, 128>}, {pipeline_mode = #tpu.pipeline_mode<synchronous>, transform_indices = @transform_4, window_bounds = array<i64: 1, 128>}, {pipeline_mode = #tpu.pipeline_mode<synchronous>, transform_indices = @transform_5, window_bounds = array<i64: 128, 128>}, {pipeline_mode = #tpu.pipeline_mode<synchronous>, transform_indices = @transform_6, window_bounds = array<i64: 1, 128>}, {transform_indices = @transform_7, window_bounds = array<i64: 2, 1024>}, {transform_indices = @transform_8, window_bounds = array<i64: 2, 128>}]} {
    %c0_i32 = arith.constant 0 : i32
    %0 = arith.cmpi eq, %arg1, %c0_i32 : i32
    %1 = arith.extui %0 : i1 to i32
    %c0_i32_0 = arith.constant 0 : i32
    %2 = arith.cmpi ne, %1, %c0_i32_0 : i32
    scf.if %2 {
      %cst_16 = arith.constant 0.000000e+00 : f32
      %19 = vector.broadcast %cst_16 : f32 to vector<2x128xf32>
      %c0_17 = arith.constant 0 : index
      %c0_18 = arith.constant 0 : index
      %20 = vector.load %arg11[%c0_17, %c0_18] : memref<2x128xf32, #tpu.memory_space<vmem>>, vector<2x128xf32>
      tpu.vector_store %arg11[%c0_17, %c0_18], %19 {strides = array<i32>} : memref<2x128xf32, #tpu.memory_space<vmem>>, vector<2x128xf32>,
    } else {
    }
    %c0 = arith.constant 0 : index
    %c0_1 = arith.constant 0 : index
    %3 = vector.load %arg2[%c0, %c0_1] : memref<2x1024xf32, #tpu.memory_space<vmem>>, vector<2x1024xf32>
    %c0_2 = arith.constant 0 : index
    %c0_3 = arith.constant 0 : index
    %4 = vector.load %arg3[%c0_2, %c0_3] : memref<1x1024xf32, #tpu.memory_space<vmem>>, vector<1x1024xf32>
    %5 = vector.broadcast %4 : vector<1x1024xf32> to vector<2x1024xf32>
    %6 = arith.mulf %3, %5 : vector<2x1024xf32>
    %c0_4 = arith.constant 0 : index
    %c0_5 = arith.constant 0 : index
    %7 = vector.load %arg4[%c0_4, %c0_5] : memref<1x1024xf32, #tpu.memory_space<vmem>>, vector<1x1024xf32>
    %8 = vector.broadcast %7 : vector<1x1024xf32> to vector<2x1024xf32>
    %9 = arith.addf %6, %8 : vector<2x1024xf32>
    %c0_6 = arith.constant 0 : index
    %c0_7 = arith.constant 0 : index
    %10 = vector.load %arg9[%c0_6, %c0_7] : memref<2x1024xf32, #tpu.memory_space<vmem>>, vector<2x1024xf32>
    tpu.vector_store %arg9[%c0_6, %c0_7], %9 {strides = array<i32>} : memref<2x1024xf32, #tpu.memory_space<vmem>>, vector<2x1024xf32>,
    %c0_8 = arith.constant 0 : index
    %c0_9 = arith.constant 0 : index
    %11 = vector.load %arg11[%c0_8, %c0_9] : memref<2x128xf32, #tpu.memory_space<vmem>>, vector<2x128xf32>
    %c0_10 = arith.constant 0 : index
    %c0_11 = arith.constant 0 : index
    %12 = vector.load %arg5[%c0_10, %c0_11] : memref<1024x128xf32, #tpu.memory_space<vmem>>, vector<1024x128xf32>
    %cst = arith.constant dense<0.000000e+00> : vector<2x128xf32>
    %13 = tpu.matmul %9, %12, %cst {dimension_numbers = #tpu.dot_dimension_numbers<[1], [0], [0], [1], [0, 0, 1, 1], [], []>} : vector<2x1024xf32>, vector<1024x128xf32>, vector<2x128xf32> -> vector<2x128xf32>
    %14 = arith.addf %11, %13 : vector<2x128xf32>
    %c0_12 = arith.constant 0 : index
    %c0_13 = arith.constant 0 : index
    %15 = vector.load %arg11[%c0_12, %c0_13] : memref<2x128xf32, #tpu.memory_space<vmem>>, vector<2x128xf32>
    tpu.vector_store %arg11[%c0_12, %c0_13], %14 {strides = array<i32>} : memref<2x128xf32, #tpu.memory_space<vmem>>, vector<2x128xf32>,
    %c0_i32_14 = arith.constant 0 : i32
    %16 = arith.cmpi eq, %arg1, %c0_i32_14 : i32
    %17 = arith.extui %16 : i1 to i32
    %c0_i32_15 = arith.constant 0 : i32
    %18 = arith.cmpi ne, %17, %c0_i32_15 : i32
    scf.if %18 {
      %c0_16 = arith.constant 0 : index
      %c0_17 = arith.constant 0 : index
      %19 = vector.load %arg11[%c0_16, %c0_17] : memref<2x128xf32, #tpu.memory_space<vmem>>, vector<2x128xf32>
      %c0_18 = arith.constant 0 : index
      %c0_19 = arith.constant 0 : index
      %20 = vector.load %arg6[%c0_18, %c0_19] : memref<1x128xf32, #tpu.memory_space<vmem>>, vector<1x128xf32>
      %21 = vector.broadcast %20 : vector<1x128xf32> to vector<2x128xf32>
      %22 = arith.addf %19, %21 : vector<2x128xf32>
      %cst_20 = arith.constant 0.000000e+00 : f32
      %23 = vector.broadcast %cst_20 : f32 to vector<2x128xf32>
      %24 = arith.maximumf %22, %23 : vector<2x128xf32>
      %c0_21 = arith.constant 0 : index
      %c0_22 = arith.constant 0 : index
      %25 = vector.load %arg7[%c0_21, %c0_22] : memref<128x128xf32, #tpu.memory_space<vmem>>, vector<128x128xf32>
      %cst_23 = arith.constant dense<0.000000e+00> : vector<2x128xf32>
      %26 = tpu.matmul %24, %25, %cst_23 {dimension_numbers = #tpu.dot_dimension_numbers<[1], [0], [0], [1], [0, 0, 1, 1], [], []>} : vector<2x128xf32>, vector<128x128xf32>, vector<2x128xf32> -> vector<2x128xf32>
      %c0_24 = arith.constant 0 : index
      %c0_25 = arith.constant 0 : index
      %27 = vector.load %arg8[%c0_24, %c0_25] : memref<1x128xf32, #tpu.memory_space<vmem>>, vector<1x128xf32>
      %28 = vector.broadcast %27 : vector<1x128xf32> to vector<2x128xf32>
      %29 = arith.addf %26, %28 : vector<2x128xf32>
      %c0_26 = arith.constant 0 : index
      %c0_27 = arith.constant 0 : index
      %30 = vector.load %arg10[%c0_26, %c0_27] : memref<2x128xf32, #tpu.memory_space<vmem>>, vector<2x128xf32>
      tpu.vector_store %arg10[%c0_26, %c0_27], %29 {strides = array<i32>} : memref<2x128xf32, #tpu.memory_space<vmem>>, vector<2x128xf32>,
    } else {
    }
    return
  }
  func.func @transform_0(%arg0: i32, %arg1: i32) -> (i32, i32) {
    %c0_i32 = arith.constant 0 : i32
    return %arg0, %arg1 : i32, i32
  }
  func.func @transform_1(%arg0: i32, %arg1: i32) -> (i32, i32) {
    %c0_i32 = arith.constant 0 : i32
    %c0_i32_0 = arith.constant 0 : i32
    return %c0_i32, %arg1 : i32, i32
  }
  func.func @transform_2(%arg0: i32, %arg1: i32) -> (i32, i32) {
    %c0_i32 = arith.constant 0 : i32
    %c0_i32_0 = arith.constant 0 : i32
    return %c0_i32, %arg1 : i32, i32
  }
  func.func @transform_3(%arg0: i32, %arg1: i32) -> (i32, i32) {
    %c0_i32 = arith.constant 0 : i32
    %c0_i32_0 = arith.constant 0 : i32
    return %arg1, %c0_i32 : i32, i32
  }
  func.func @transform_4(%arg0: i32, %arg1: i32) -> (i32, i32) {
    %c0_i32 = arith.constant 0 : i32
    %c0_i32_0 = arith.constant 0 : i32
    %c0_i32_1 = arith.constant 0 : i32
    return %c0_i32, %c0_i32_0 : i32, i32
  }
  func.func @transform_5(%arg0: i32, %arg1: i32) -> (i32, i32) {
    %c0_i32 = arith.constant 0 : i32
    %c0_i32_0 = arith.constant 0 : i32
    %c0_i32_1 = arith.constant 0 : i32
    return %c0_i32, %c0_i32_0 : i32, i32
  }
  func.func @transform_6(%arg0: i32, %arg1: i32) -> (i32, i32) {
    %c0_i32 = arith.constant 0 : i32
    %c0_i32_0 = arith.constant 0 : i32
    %c0_i32_1 = arith.constant 0 : i32
    return %c0_i32, %c0_i32_0 : i32, i32
  }
  func.func @transform_7(%arg0: i32, %arg1: i32) -> (i32, i32) {
    %c0_i32 = arith.constant 0 : i32
    return %arg0, %arg1 : i32, i32
  }
  func.func @transform_8(%arg0: i32, %arg1: i32) -> (i32, i32) {
    %c0_i32 = arith.constant 0 : i32
    %c0_i32_0 = arith.constant 0 : i32
    return %arg0, %c0_i32 : i32, i32
  }
}

</mosaic_0001>

<llo_original>
// kernel: tpu_custom_call.1
$region0: #{tpu_custom_call.1}
  #allocation0 [shape = 'u32[]', space=smem, size = 0x4, offset = 0x4, fixed_abs, tag = 'smem constant byte address 0x4 - core index']
  #allocation1 [shape = 'u32[144,128]{1,0:T(1,128)}', space=vmem, size = 0x12000, scoped, tag = 'internal scratch']
  #allocation2 [shape = 'f32[2,128]{1,0:T(2,128)}', space=vmem, size = 0x400, scoped, tag = 'scratch operand']
  %s0 = inlined_call_operand.hbm [shape: f32[2,1024], index: 0, kind: input, shape index: {}]
  %s1 = inlined_call_operand.hbm [shape: f32[1,1024], index: 1, kind: input, shape index: {}]
  %s2 = inlined_call_operand.hbm [shape: f32[1,1024], index: 2, kind: input, shape index: {}]
  %s3 = inlined_call_operand.hbm [shape: f32[1024,128], index: 3, kind: input, shape index: {}]
  %s4 = inlined_call_operand.vmem [shape: f32[1,128], index: 4, kind: input, shape index: {}]
  %s5 = inlined_call_operand.hbm [shape: f32[128,128], index: 5, kind: input, shape index: {}]
  %s6 = inlined_call_operand.vmem [shape: f32[1,128], index: 6, kind: input, shape index: {}]
  %s7 = inlined_call_operand.hbm [shape: f32[2,1024], index: 7, kind: output, shape index: {0}]
  %s8 = inlined_call_operand.hbm [shape: f32[2,128], index: 8, kind: output, shape index: {1}]
  %9 = xla_tuple %s7, %s8
  %s10 = sld [smem:[#allocation0]]
  $region74: #{tpu_custom_call.1} parent=0
    _
  %s12 = ssub.s32 1, %s10
  %s13 = scalar_select 0, %s12, %s10
  $region1: #{tpu_custom_call.1} parent=0
    #allocation3 [shape = 'u8[8192]{0}', space=vmem, size = 0x2000, scoped, tag = 'input window, operand 0, single buffered']
    #allocation4 [shape = 's32[1]{0}', space=sflag, size = 0x4, scoped, tag = 'scoped memory for tpu_custom_call.1']
    #allocation5 [shape = 's32[1]{0}', space=sflag, size = 0x4, scoped, tag = 'scoped memory for tpu_custom_call.1']
    #allocation6 [shape = 'u8[4096]{0}', space=vmem, size = 0x1000, scoped, tag = 'input window, operand 1, single buffered']
    #allocation7 [shape = 's32[1]{0}', space=sflag, size = 0x4, scoped, tag = 'scoped memory for tpu_custom_call.1']
    #allocation8 [shape = 'u8[4096]{0}', space=vmem, size = 0x1000, scoped, tag = 'input window, operand 2, single buffered']
    #allocation9 [shape = 'u8[524288]{0}', space=vmem, size = 0x80000, scoped, tag = 'input window, operand 3, single buffered']
    #allocation10 [shape = 's32[1]{0}', space=sflag, size = 0x4, scoped, tag = 'scoped memory for tpu_custom_call.1']
    #allocation11 [shape = 'u8[65536]{0}', space=vmem, size = 0x10000, scoped, tag = 'input window, operand 5, single buffered']
    #allocation12 [shape = 'u8[8192]{0}', space=vmem, size = 0x2000, scoped, tag = 'output window, operand 0, single buffered']
    #allocation13 [shape = 'u8[1024]{0}', space=vmem, size = 0x400, scoped, tag = 'output window, operand 1, single buffered']
    #allocation14 [shape = 's32[1]{0}', space=sflag, size = 0x4, scoped, tag = 'scoped memory for tpu_custom_call.1']
    %14 = vsyncpa [#allocation4], 0
    %15 = vsyncpa [#allocation7], 0
    %16 = vsyncpa [#allocation10], 0
    %17 = vsyncpa [#allocation5], 0
    %18 = vsyncpa [#allocation14], 0
    // Predicated region
    $region2: #{tpu_custom_call.1} parent=1 // pred_check
      _
    $region3: #{tpu_custom_call.1} parent=1 // pred_check_branch
      %20 = sbr.rel (0) target = $region5
    $region4: #{tpu_custom_call.1} parent=1 // pred_region
      %s22 = ssub.s32 256, 256
      %23 = vsyncadd [#allocation4], %s22
      %s25 = sshll.u32 [#allocation3], 4
      %s26 = int_to_ptr.vmem [resolvable:$true] %s25
      %28 = dma.hbm_to_vmem [thread:$0]  %s0, 256, %s26, [#allocation4]
    $region5: #{tpu_custom_call.1} parent=1 // pred_fallthru
      _
    // Predicated region
    $region6: #{tpu_custom_call.1} parent=1 // pred_check
      _
    $region7: #{tpu_custom_call.1} parent=1 // pred_check_branch
      %30 = sbr.rel (0) target = $region9
    $region8: #{tpu_custom_call.1} parent=1 // pred_region
      %s32 = ssub.s32 128, 128
      %33 = vsyncadd [#allocation7], %s32
      %s35 = sshll.u32 [#allocation6], 4
      %s36 = int_to_ptr.vmem [resolvable:$true] %s35
      %38 = dma.hbm_to_vmem [thread:$0]  %s1, 128, %s36, [#allocation7]
    $region9: #{tpu_custom_call.1} parent=1 // pred_fallthru
      _
    // Predicated region
    $region10: #{tpu_custom_call.1} parent=1 // pred_check
      _
    $region11: #{tpu_custom_call.1} parent=1 // pred_check_branch
      %40 = sbr.rel (0) target = $region13
    $region12: #{tpu_custom_call.1} parent=1 // pred_region
      %s42 = ssub.s32 128, 128
      %43 = vsyncadd [#allocation7], %s42
      %s45 = sshll.u32 [#allocation8], 4
      %s46 = int_to_ptr.vmem [resolvable:$true] %s45
      %48 = dma.hbm_to_vmem [thread:$0]  %s2, 128, %s46, [#allocation7]
    $region13: #{tpu_custom_call.1} parent=1 // pred_fallthru
      _
    // Predicated region
    $region14: #{tpu_custom_call.1} parent=1 // pred_check
      _
    $region15: #{tpu_custom_call.1} parent=1 // pred_check_branch
      %50 = sbr.rel (0) target = $region17
    $region16: #{tpu_custom_call.1} parent=1 // pred_region
      %s52 = ssub.s32 16384, 16384
      %53 = vsyncadd [#allocation10], %s52
      %s54 = sshll.u32 [#allocation9], 4
      %s55 = int_to_ptr.vmem [resolvable:$true] %s54
      %60 = dma.hbm_to_vmem [thread:$0]  %s3, 16384, %s55, [#allocation10], 128, 128, 8
    $region17: #{tpu_custom_call.1} parent=1 // pred_fallthru
      _
    // Predicated region
    $region18: #{tpu_custom_call.1} parent=1 // pred_check
      _
    $region19: #{tpu_custom_call.1} parent=1 // pred_check_branch
      %62 = sbr.rel (0) target = $region21
    $region20: #{tpu_custom_call.1} parent=1 // pred_region
      _
    $region21: #{tpu_custom_call.1} parent=1 // pred_fallthru
      _
    // Predicated region
    $region22: #{tpu_custom_call.1} parent=1 // pred_check
      _
    $region23: #{tpu_custom_call.1} parent=1 // pred_check_branch
      %64 = sbr.rel (0) target = $region25
    $region24: #{tpu_custom_call.1} parent=1 // pred_region
      %s66 = ssub.s32 2048, 2048
      %67 = vsyncadd [#allocation10], %s66
      %s68 = sshll.u32 [#allocation11], 4
      %s69 = int_to_ptr.vmem [resolvable:$true] %s68
      %74 = dma.hbm_to_vmem [thread:$0]  %s5, 2048, %s69, [#allocation10], 128, 128, 8
    $region25: #{tpu_custom_call.1} parent=1 // pred_fallthru
      _
    // Predicated region
    $region26: #{tpu_custom_call.1} parent=1 // pred_check
      _
    $region27: #{tpu_custom_call.1} parent=1 // pred_check_branch
      %76 = sbr.rel (0) target = $region29
    $region28: #{tpu_custom_call.1} parent=1 // pred_region
      _
    $region29: #{tpu_custom_call.1} parent=1 // pred_fallthru
      _
    // Predicated region
    $region30: #{tpu_custom_call.1} parent=1 // pred_check
      _
    $region31: #{tpu_custom_call.1} parent=1 // pred_check_branch
      %78 = sbr.rel (0) target = $region33
    $region32: #{tpu_custom_call.1} parent=1 // pred_region
      %79 = dma.done [#allocation4], 256
    $region33: #{tpu_custom_call.1} parent=1 // pred_fallthru
      _
    // Predicated region
    $region34: #{tpu_custom_call.1} parent=1 // pred_check
      _
    $region35: #{tpu_custom_call.1} parent=1 // pred_check_branch
      %81 = sbr.rel (0) target = $region37
    $region36: #{tpu_custom_call.1} parent=1 // pred_region
      %82 = dma.done [#allocation7], 128
    $region37: #{tpu_custom_call.1} parent=1 // pred_fallthru
      _
    // Predicated region
    $region38: #{tpu_custom_call.1} parent=1 // pred_check
      _
    $region39: #{tpu_custom_call.1} parent=1 // pred_check_branch
      %84 = sbr.rel (0) target = $region41
    $region40: #{tpu_custom_call.1} parent=1 // pred_region
      %85 = dma.done [#allocation7], 128
    $region41: #{tpu_custom_call.1} parent=1 // pred_fallthru
      _
    // Predicated region
    $region42: #{tpu_custom_call.1} parent=1 // pred_check
      _
    $region43: #{tpu_custom_call.1} parent=1 // pred_check_branch
      %87 = sbr.rel (0) target = $region45
    $region44: #{tpu_custom_call.1} parent=1 // pred_region
      %88 = dma.done [#allocation10], 16384
    $region45: #{tpu_custom_call.1} parent=1 // pred_fallthru
      _
    // Predicated region
    $region46: #{tpu_custom_call.1} parent=1 // pred_check
      _
    $region47: #{tpu_custom_call.1} parent=1 // pred_check_branch
      %90 = sbr.rel (0) target = $region49
    $region48: #{tpu_custom_call.1} parent=1 // pred_region
      %91 = dma.done [#allocation10], 2048
    $region49: #{tpu_custom_call.1} parent=1 // pred_fallthru
      _
    %p92 = scmp.eq.s32.totalorder 0, 0
    // Predicated region
    $region50: #{tpu_custom_call.1} parent=1 // pred_check
      %p93 = pneg %p92
    $region51: #{tpu_custom_call.1} parent=1 // pred_check_branch
      %95 = sbr.rel (%p93) target = $region53
    $region52: #{tpu_custom_call.1} parent=1 // pred_region
      %96 = vst [vmem:[#allocation2] sm:$0x3] 0.0
    $region53: #{tpu_custom_call.1} parent=1 // pred_fallthru
      _
    %v97 = vld [vmem:[#allocation3] sm:$0xff]
    %v98 = vld [vmem:[#allocation3 + $0x8] sm:$0xff]
    %v99 = vld [vmem:[#allocation6] sm:$0xff]
    %v101 = vlaneseq
    %v102 = vshrl.u32 %v101, 7
    %v103 = vsub.s32 0, %v102
    %v104 = vrot.slane %v99, %v103
    %v105 = vlaneseq
    %v106 = vshrl.u32 %v105, 7
    %v107 = vsub.s32 1, %v106
    %v108 = vrot.slane %v99, %v107
    %v109 = vlaneseq
    %v110 = vshrl.u32 %v109, 7
    %v111 = vsub.s32 2, %v110
    %v112 = vrot.slane %v99, %v111
    %v113 = vlaneseq
    %v114 = vshrl.u32 %v113, 7
    %v115 = vsub.s32 3, %v114
    %v116 = vrot.slane %v99, %v115
    %v117 = vlaneseq
    %v118 = vshrl.u32 %v117, 7
    %v119 = vsub.s32 4, %v118
    %v120 = vrot.slane %v99, %v119
    %v121 = vlaneseq
    %v122 = vshrl.u32 %v121, 7
    %v123 = vsub.s32 5, %v122
    %v124 = vrot.slane %v99, %v123
    %v125 = vlaneseq
    %v126 = vshrl.u32 %v125, 7
    %v127 = vsub.s32 6, %v126
    %v128 = vrot.slane %v99, %v127
    %v129 = vlaneseq
    %v130 = vshrl.u32 %v129, 7
    %v131 = vsub.s32 7, %v130
    %v132 = vrot.slane %v99, %v131
    %v133 = vcombine.low %v104, %v108
    %v134 = vcombine.low %v112, %v116
    %v136 = vunpack.c.l.s4 1983009808
    %v137 = vunpack.c.0.s8 %v136
    %v138 = vlaneseq
    %v139 = vshrl.u32 %v138, 7
    %v140 = vsub.s32 %v137, %v139
    %v141 = vrot.slane %v133, %v140
    %v143 = vunpack.c.l.s4 1983009808
    %v144 = vunpack.c.0.s8 %v143
    %v145 = vlaneseq
    %v146 = vshrl.u32 %v145, 7
    %v147 = vsub.s32 %v144, %v146
    %v148 = vrot.slane %v134, %v147
    %v149 = vcombine.low %v141, %v148
    %v150 = vcombine.low %v120, %v124
    %v151 = vcombine.low %v128, %v132
    %v153 = vunpack.c.l.s4 1983009808
    %v154 = vunpack.c.0.s8 %v153
    %v155 = vlaneseq
    %v156 = vshrl.u32 %v155, 7
    %v157 = vsub.s32 %v154, %v156
    %v158 = vrot.slane %v150, %v157
    %v160 = vunpack.c.l.s4 1983009808
    %v161 = vunpack.c.0.s8 %v160
    %v162 = vlaneseq
    %v163 = vshrl.u32 %v162, 7
    %v164 = vsub.s32 %v161, %v163
    %v165 = vrot.slane %v151, %v164
    %v166 = vcombine.low %v158, %v165
    %v169 = vmul.f32 %v97, %v149
    %v170 = vmul.f32 %v98, %v166
    %v171 = vld [vmem:[#allocation8] sm:$0xff]
    %v173 = vlaneseq
    %v174 = vshrl.u32 %v173, 7
    %v175 = vsub.s32 0, %v174
    %v176 = vrot.slane %v171, %v175
    %v177 = vlaneseq
    %v178 = vshrl.u32 %v177, 7
    %v179 = vsub.s32 1, %v178
    %v180 = vrot.slane %v171, %v179
    %v181 = vlaneseq
    %v182 = vshrl.u32 %v181, 7
    %v183 = vsub.s32 2, %v182
    %v184 = vrot.slane %v171, %v183
    %v185 = vlaneseq
    %v186 = vshrl.u32 %v185, 7
    %v187 = vsub.s32 3, %v186
    %v188 = vrot.slane %v171, %v187
    %v189 = vlaneseq
    %v190 = vshrl.u32 %v189, 7
    %v191 = vsub.s32 4, %v190
    %v192 = vrot.slane %v171, %v191
    %v193 = vlaneseq
    %v194 = vshrl.u32 %v193, 7
    %v195 = vsub.s32 5, %v194
    %v196 = vrot.slane %v171, %v195
    %v197 = vlaneseq
    %v198 = vshrl.u32 %v197, 7
    %v199 = vsub.s32 6, %v198
    %v200 = vrot.slane %v171, %v199
    %v201 = vlaneseq
    %v202 = vshrl.u32 %v201, 7
    %v203 = vsub.s32 7, %v202
    %v204 = vrot.slane %v171, %v203
    %v205 = vcombine.low %v176, %v180
    %v206 = vcombine.low %v184, %v188
    %v208 = vunpack.c.l.s4 1983009808
    %v209 = vunpack.c.0.s8 %v208
    %v210 = vlaneseq
    %v211 = vshrl.u32 %v210, 7
    %v212 = vsub.s32 %v209, %v211
    %v213 = vrot.slane %v205, %v212
    %v215 = vunpack.c.l.s4 1983009808
    %v216 = vunpack.c.0.s8 %v215
    %v217 = vlaneseq
    %v218 = vshrl.u32 %v217, 7
    %v219 = vsub.s32 %v216, %v218
    %v220 = vrot.slane %v206, %v219
    %v221 = vcombine.low %v213, %v220
    %v222 = vcombine.low %v192, %v196
    %v223 = vcombine.low %v200, %v204
    %v225 = vunpack.c.l.s4 1983009808
    %v226 = vunpack.c.0.s8 %v225
    %v227 = vlaneseq
    %v228 = vshrl.u32 %v227, 7
    %v229 = vsub.s32 %v226, %v228
    %v230 = vrot.slane %v222, %v229
    %v232 = vunpack.c.l.s4 1983009808
    %v233 = vunpack.c.0.s8 %v232
    %v234 = vlaneseq
    %v235 = vshrl.u32 %v234, 7
    %v236 = vsub.s32 %v233, %v235
    %v237 = vrot.slane %v223, %v236
    %v238 = vcombine.low %v230, %v237
    %v241 = vadd.f32 %v169, %v221
    %v242 = vadd.f32 %v170, %v238
    %243 = vst [vmem:[#allocation12] sm:$0xff] %v241
    %244 = vst [vmem:[#allocation12 + $0x8] sm:$0xff] %v242
    %v245 = vld [vmem:[#allocation2] sm:$0x3]
    %v246 = vld [vmem:[#allocation9] sm:$0xff]
    %v247 = vld [vmem:[#allocation9 + $0x8] sm:$0xff]
    %v248 = vld [vmem:[#allocation9 + $0x10] sm:$0xff]
    %v249 = vld [vmem:[#allocation9 + $0x18] sm:$0xff]
    %v250 = vld [vmem:[#allocation9 + $0x20] sm:$0xff]
    %v251 = vld [vmem:[#allocation9 + $0x28] sm:$0xff]
    %v252 = vld [vmem:[#allocation9 + $0x30] sm:$0xff]
    %v253 = vld [vmem:[#allocation9 + $0x38] sm:$0xff]
    %v254 = vld [vmem:[#allocation9 + $0x40] sm:$0xff]
    %v255 = vld [vmem:[#allocation9 + $0x48] sm:$0xff]
    %v256 = vld [vmem:[#allocation9 + $0x50] sm:$0xff]
    %v257 = vld [vmem:[#allocation9 + $0x58] sm:$0xff]
    %v258 = vld [vmem:[#allocation9 + $0x60] sm:$0xff]
    %v259 = vld [vmem:[#allocation9 + $0x68] sm:$0xff]
    %v260 = vld [vmem:[#allocation9 + $0x70] sm:$0xff]
    %v261 = vld [vmem:[#allocation9 + $0x78] sm:$0xff]
    %v262 = vld [vmem:[#allocation9 + $0x80] sm:$0xff]
    %v263 = vld [vmem:[#allocation9 + $0x88] sm:$0xff]
    %v264 = vld [vmem:[#allocation9 + $0x90] sm:$0xff]
    %v265 = vld [vmem:[#allocation9 + $0x98] sm:$0xff]
    %v266 = vld [vmem:[#allocation9 + $0xa0] sm:$0xff]
    %v267 = vld [vmem:[#allocation9 + $0xa8] sm:$0xff]
    %v268 = vld [vmem:[#allocation9 + $0xb0] sm:$0xff]
    %v269 = vld [vmem:[#allocation9 + $0xb8] sm:$0xff]
    %v270 = vld [vmem:[#allocation9 + $0xc0] sm:$0xff]
    %v271 = vld [vmem:[#allocation9 + $0xc8] sm:$0xff]
    %v272 = vld [vmem:[#allocation9 + $0xd0] sm:$0xff]
    %v273 = vld [vmem:[#allocation9 + $0xd8] sm:$0xff]
    %v274 = vld [vmem:[#allocation9 + $0xe0] sm:$0xff]
    %v275 = vld [vmem:[#allocation9 + $0xe8] sm:$0xff]
    %v276 = vld [vmem:[#allocation9 + $0xf0] sm:$0xff]
    %v277 = vld [vmem:[#allocation9 + $0xf8] sm:$0xff]
    %v278 = vld [vmem:[#allocation9 + $0x100] sm:$0xff]
    %v279 = vld [vmem:[#allocation9 + $0x108] sm:$0xff]
    %v280 = vld [vmem:[#allocation9 + $0x110] sm:$0xff]
    %v281 = vld [vmem:[#allocation9 + $0x118] sm:$0xff]
    %v282 = vld [vmem:[#allocation9 + $0x120] sm:$0xff]
    %v283 = vld [vmem:[#allocation9 + $0x128] sm:$0xff]
    %v284 = vld [vmem:[#allocation9 + $0x130] sm:$0xff]
    %v285 = vld [vmem:[#allocation9 + $0x138] sm:$0xff]
    %v286 = vld [vmem:[#allocation9 + $0x140] sm:$0xff]
    %v287 = vld [vmem:[#allocation9 + $0x148] sm:$0xff]
    %v288 = vld [vmem:[#allocation9 + $0x150] sm:$0xff]
    %v289 = vld [vmem:[#allocation9 + $0x158] sm:$0xff]
    %v290 = vld [vmem:[#allocation9 + $0x160] sm:$0xff]
    %v291 = vld [vmem:[#allocation9 + $0x168] sm:$0xff]
    %v292 = vld [vmem:[#allocation9 + $0x170] sm:$0xff]
    %v293 = vld [vmem:[#allocation9 + $0x178] sm:$0xff]
    %v294 = vld [vmem:[#allocation9 + $0x180] sm:$0xff]
    %v295 = vld [vmem:[#allocation9 + $0x188] sm:$0xff]
    %v296 = vld [vmem:[#allocation9 + $0x190] sm:$0xff]
    %v297 = vld [vmem:[#allocation9 + $0x198] sm:$0xff]
    %v298 = vld [vmem:[#allocation9 + $0x1a0] sm:$0xff]
    %v299 = vld [vmem:[#allocation9 + $0x1a8] sm:$0xff]
    %v300 = vld [vmem:[#allocation9 + $0x1b0] sm:$0xff]
    %v301 = vld [vmem:[#allocation9 + $0x1b8] sm:$0xff]
    %v302 = vld [vmem:[#allocation9 + $0x1c0] sm:$0xff]
    %v303 = vld [vmem:[#allocation9 + $0x1c8] sm:$0xff]
    %v304 = vld [vmem:[#allocation9 + $0x1d0] sm:$0xff]
    %v305 = vld [vmem:[#allocation9 + $0x1d8] sm:$0xff]
    %v306 = vld [vmem:[#allocation9 + $0x1e0] sm:$0xff]
    %v307 = vld [vmem:[#allocation9 + $0x1e8] sm:$0xff]
    %v308 = vld [vmem:[#allocation9 + $0x1f0] sm:$0xff]
    %v309 = vld [vmem:[#allocation9 + $0x1f8] sm:$0xff]
    %v310 = vld [vmem:[#allocation9 + $0x200] sm:$0xff]
    %v311 = vld [vmem:[#allocation9 + $0x208] sm:$0xff]
    %v312 = vld [vmem:[#allocation9 + $0x210] sm:$0xff]
    %v313 = vld [vmem:[#allocation9 + $0x218] sm:$0xff]
    %v314 = vld [vmem:[#allocation9 + $0x220] sm:$0xff]
    %v315 = vld [vmem:[#allocation9 + $0x228] sm:$0xff]
    %v316 = vld [vmem:[#allocation9 + $0x230] sm:$0xff]
    %v317 = vld [vmem:[#allocation9 + $0x238] sm:$0xff]
    %v318 = vld [vmem:[#allocation9 + $0x240] sm:$0xff]
    %v319 = vld [vmem:[#allocation9 + $0x248] sm:$0xff]
    %v320 = vld [vmem:[#allocation9 + $0x250] sm:$0xff]
    %v321 = vld [vmem:[#allocation9 + $0x258] sm:$0xff]
    %v322 = vld [vmem:[#allocation9 + $0x260] sm:$0xff]
    %v323 = vld [vmem:[#allocation9 + $0x268] sm:$0xff]
    %v324 = vld [vmem:[#allocation9 + $0x270] sm:$0xff]
    %v325 = vld [vmem:[#allocation9 + $0x278] sm:$0xff]
    %v326 = vld [vmem:[#allocation9 + $0x280] sm:$0xff]
    %v327 = vld [vmem:[#allocation9 + $0x288] sm:$0xff]
    %v328 = vld [vmem:[#allocation9 + $0x290] sm:$0xff]
    %v329 = vld [vmem:[#allocation9 + $0x298] sm:$0xff]
    %v330 = vld [vmem:[#allocation9 + $0x2a0] sm:$0xff]
    %v331 = vld [vmem:[#allocation9 + $0x2a8] sm:$0xff]
    %v332 = vld [vmem:[#allocation9 + $0x2b0] sm:$0xff]
    %v333 = vld [vmem:[#allocation9 + $0x2b8] sm:$0xff]
    %v334 = vld [vmem:[#allocation9 + $0x2c0] sm:$0xff]
    %v335 = vld [vmem:[#allocation9 + $0x2c8] sm:$0xff]
    %v336 = vld [vmem:[#allocation9 + $0x2d0] sm:$0xff]
    %v337 = vld [vmem:[#allocation9 + $0x2d8] sm:$0xff]
    %v338 = vld [vmem:[#allocation9 + $0x2e0] sm:$0xff]
    %v339 = vld [vmem:[#allocation9 + $0x2e8] sm:$0xff]
    %v340 = vld [vmem:[#allocation9 + $0x2f0] sm:$0xff]
    %v341 = vld [vmem:[#allocation9 + $0x2f8] sm:$0xff]
    %v342 = vld [vmem:[#allocation9 + $0x300] sm:$0xff]
    %v343 = vld [vmem:[#allocation9 + $0x308] sm:$0xff]
    %v344 = vld [vmem:[#allocation9 + $0x310] sm:$0xff]
    %v345 = vld [vmem:[#allocation9 + $0x318] sm:$0xff]
    %v346 = vld [vmem:[#allocation9 + $0x320] sm:$0xff]
    %v347 = vld [vmem:[#allocation9 + $0x328] sm:$0xff]
    %v348 = vld [vmem:[#allocation9 + $0x330] sm:$0xff]
    %v349 = vld [vmem:[#allocation9 + $0x338] sm:$0xff]
    %v350 = vld [vmem:[#allocation9 + $0x340] sm:$0xff]
    %v351 = vld [vmem:[#allocation9 + $0x348] sm:$0xff]
    %v352 = vld [vmem:[#allocation9 + $0x350] sm:$0xff]
    %v353 = vld [vmem:[#allocation9 + $0x358] sm:$0xff]
    %v354 = vld [vmem:[#allocation9 + $0x360] sm:$0xff]
    %v355 = vld [vmem:[#allocation9 + $0x368] sm:$0xff]
    %v356 = vld [vmem:[#allocation9 + $0x370] sm:$0xff]
    %v357 = vld [vmem:[#allocation9 + $0x378] sm:$0xff]
    %v358 = vld [vmem:[#allocation9 + $0x380] sm:$0xff]
    %v359 = vld [vmem:[#allocation9 + $0x388] sm:$0xff]
    %v360 = vld [vmem:[#allocation9 + $0x390] sm:$0xff]
    %v361 = vld [vmem:[#allocation9 + $0x398] sm:$0xff]
    %v362 = vld [vmem:[#allocation9 + $0x3a0] sm:$0xff]
    %v363 = vld [vmem:[#allocation9 + $0x3a8] sm:$0xff]
    %v364 = vld [vmem:[#allocation9 + $0x3b0] sm:$0xff]
    %v365 = vld [vmem:[#allocation9 + $0x3b8] sm:$0xff]
    %v366 = vld [vmem:[#allocation9 + $0x3c0] sm:$0xff]
    %v367 = vld [vmem:[#allocation9 + $0x3c8] sm:$0xff]
    %v368 = vld [vmem:[#allocation9 + $0x3d0] sm:$0xff]
    %v369 = vld [vmem:[#allocation9 + $0x3d8] sm:$0xff]
    %v370 = vld [vmem:[#allocation9 + $0x3e0] sm:$0xff]
    %v371 = vld [vmem:[#allocation9 + $0x3e8] sm:$0xff]
    %v372 = vld [vmem:[#allocation9 + $0x3f0] sm:$0xff]
    %v373 = vld [vmem:[#allocation9 + $0x3f8] sm:$0xff]
    %v376 = vcombine.high %v241, %v241
    %v378 = vunpack.c.l.s4 1983009808
    %v379 = vunpack.c.0.s8 %v378
    %v380 = vlaneseq
    %v381 = vshrl.u32 %v380, 7
    %v382 = vsub.s32 %v379, %v381
    %v383 = vrot.slane %v241, %v382
    %v385 = vunpack.c.l.s4 1983009808
    %v386 = vunpack.c.0.s8 %v385
    %v387 = vlaneseq
    %v388 = vshrl.u32 %v387, 7
    %v389 = vsub.s32 %v386, %v388
    %v390 = vrot.slane %v376, %v389
    %v391 = vcombine.high %v383, %v383
    %v392 = vcombine.high %v390, %v390
    %v393 = vcombine.high %v242, %v242
    %v395 = vunpack.c.l.s4 1983009808
    %v396 = vunpack.c.0.s8 %v395
    %v397 = vlaneseq
    %v398 = vshrl.u32 %v397, 7
    %v399 = vsub.s32 %v396, %v398
    %v400 = vrot.slane %v242, %v399
    %v402 = vunpack.c.l.s4 1983009808
    %v403 = vunpack.c.0.s8 %v402
    %v404 = vlaneseq
    %v405 = vshrl.u32 %v404, 7
    %v406 = vsub.s32 %v403, %v405
    %v407 = vrot.slane %v393, %v406
    %v408 = vcombine.high %v400, %v400
    %v409 = vcombine.high %v407, %v407
    %418 = vmatprep.subr.mxu0 0.0
    %419 = vmatpush1.msra.mxu0 %v261
    %420 = vmatprep.subr.mxu0 0.0
    %421 = vmatpush1.msra.mxu0 %v260
    %422 = vmatprep.subr.mxu0 0.0
    %423 = vmatpush1.msra.mxu0 %v259
    %424 = vmatprep.subr.mxu0 0.0
    %425 = vmatpush1.msra.mxu0 %v258
    %426 = vmatprep.subr.mxu0 0.0
    %427 = vmatpush1.msra.mxu0 %v257
    %428 = vmatprep.subr.mxu0 0.0
    %429 = vmatpush1.msra.mxu0 %v256
    %430 = vmatprep.subr.mxu0 0.0
    %431 = vmatpush1.msra.mxu0 %v255
    %432 = vmatprep.subr.mxu0 0.0
    %433 = vmatpush1.msra.mxu0 %v254
    %434 = vmatprep.subr.mxu0 0.0
    %435 = vmatpush1.msra.mxu0 %v253
    %436 = vmatprep.subr.mxu0 0.0
    %437 = vmatpush1.msra.mxu0 %v252
    %438 = vmatprep.subr.mxu0 0.0
    %439 = vmatpush1.msra.mxu0 %v251
    %440 = vmatprep.subr.mxu0 0.0
    %441 = vmatpush1.msra.mxu0 %v250
    %442 = vmatprep.subr.mxu0 0.0
    %443 = vmatpush1.msra.mxu0 %v249
    %444 = vmatprep.subr.mxu0 0.0
    %445 = vmatpush1.msra.mxu0 %v248
    %446 = vmatprep.subr.mxu0 0.0
    %447 = vmatpush1.msra.mxu0 %v247
    %448 = vmatprep.subr.mxu0 0.0
    %449 = vmatpush1.msra.mxu0 %v246
    %450 = vmatprep.subr.mxu0 0.0
    %451 = vmatpush2.msra.mxu0 %v277
    %452 = vmatprep.subr.mxu0 0.0
    %453 = vmatpush2.msra.mxu0 %v276
    %454 = vmatprep.subr.mxu0 0.0
    %455 = vmatpush2.msra.mxu0 %v275
    %456 = vmatprep.subr.mxu0 0.0
    %457 = vmatpush2.msra.mxu0 %v274
    %458 = vmatprep.subr.mxu0 0.0
    %459 = vmatpush2.msra.mxu0 %v273
    %460 = vmatprep.subr.mxu0 0.0
    %461 = vmatpush2.msra.mxu0 %v272
    %462 = vmatprep.subr.mxu0 0.0
    %463 = vmatpush2.msra.mxu0 %v271
    %464 = vmatprep.subr.mxu0 0.0
    %465 = vmatpush2.msra.mxu0 %v270
    %466 = vmatprep.subr.mxu0 0.0
    %467 = vmatpush2.msra.mxu0 %v269
    %468 = vmatprep.subr.mxu0 0.0
    %469 = vmatpush2.msra.mxu0 %v268
    %470 = vmatprep.subr.mxu0 0.0
    %471 = vmatpush2.msra.mxu0 %v267
    %472 = vmatprep.subr.mxu0 0.0
    %473 = vmatpush2.msra.mxu0 %v266
    %474 = vmatprep.subr.mxu0 0.0
    %475 = vmatpush2.msra.mxu0 %v265
    %476 = vmatprep.subr.mxu0 0.0
    %477 = vmatpush2.msra.mxu0 %v264
    %478 = vmatprep.subr.mxu0 0.0
    %479 = vmatpush2.msra.mxu0 %v263
    %480 = vmatprep.subr.mxu0 0.0
    %481 = vmatpush2.msra.mxu0 %v262
    %482 = vmatprep.mubr.f32.mxu0 %v391
    %483 = vmatmul.mubr.f32.gmra.mxu0 %v383
    %v484 = vpop.f32.mrf.mxu0
    %v485 = vadd.f32 0.0, %v484
    %v486 = vpop.f32.mrf.mxu0
    %487 = vdwg.mxu0
    %488 = vmatprep.subr.mxu0 0.0
    %489 = vmatpush1.msra.mxu0 %v293
    %490 = vmatprep.subr.mxu0 0.0
    %491 = vmatpush1.msra.mxu0 %v292
    %492 = vmatprep.subr.mxu0 0.0
    %493 = vmatpush1.msra.mxu0 %v291
    %494 = vmatprep.subr.mxu0 0.0
    %495 = vmatpush1.msra.mxu0 %v290
    %496 = vmatprep.subr.mxu0 0.0
    %497 = vmatpush1.msra.mxu0 %v289
    %498 = vmatprep.subr.mxu0 0.0
    %499 = vmatpush1.msra.mxu0 %v288
    %500 = vmatprep.subr.mxu0 0.0
    %501 = vmatpush1.msra.mxu0 %v287
    %502 = vmatprep.subr.mxu0 0.0
    %503 = vmatpush1.msra.mxu0 %v286
    %504 = vmatprep.subr.mxu0 0.0
    %505 = vmatpush1.msra.mxu0 %v285
    %506 = vmatprep.subr.mxu0 0.0
    %507 = vmatpush1.msra.mxu0 %v284
    %508 = vmatprep.subr.mxu0 0.0
    %509 = vmatpush1.msra.mxu0 %v283
    %510 = vmatprep.subr.mxu0 0.0
    %511 = vmatpush1.msra.mxu0 %v282
    %512 = vmatprep.subr.mxu0 0.0
    %513 = vmatpush1.msra.mxu0 %v281
    %514 = vmatprep.subr.mxu0 0.0
    %515 = vmatpush1.msra.mxu0 %v280
    %516 = vmatprep.subr.mxu0 0.0
    %517 = vmatpush1.msra.mxu0 %v279
    %518 = vmatprep.subr.mxu0 0.0
    %519 = vmatpush1.msra.mxu0 %v278
    %520 = vmatprep.subr.mxu0 0.0
    %521 = vmatpush2.msra.mxu0 %v309
    %522 = vmatprep.subr.mxu0 0.0
    %523 = vmatpush2.msra.mxu0 %v308
    %524 = vmatprep.subr.mxu0 0.0
    %525 = vmatpush2.msra.mxu0 %v307
    %526 = vmatprep.subr.mxu0 0.0
    %527 = vmatpush2.msra.mxu0 %v306
    %528 = vmatprep.subr.mxu0 0.0
    %529 = vmatpush2.msra.mxu0 %v305
    %530 = vmatprep.subr.mxu0 0.0
    %531 = vmatpush2.msra.mxu0 %v304
    %532 = vmatprep.subr.mxu0 0.0
    %533 = vmatpush2.msra.mxu0 %v303
    %534 = vmatprep.subr.mxu0 0.0
    %535 = vmatpush2.msra.mxu0 %v302
    %536 = vmatprep.subr.mxu0 0.0
    %537 = vmatpush2.msra.mxu0 %v301
    %538 = vmatprep.subr.mxu0 0.0
    %539 = vmatpush2.msra.mxu0 %v300
    %540 = vmatprep.subr.mxu0 0.0
    %541 = vmatpush2.msra.mxu0 %v299
    %542 = vmatprep.subr.mxu0 0.0
    %543 = vmatpush2.msra.mxu0 %v298
    %544 = vmatprep.subr.mxu0 0.0
    %545 = vmatpush2.msra.mxu0 %v297
    %546 = vmatprep.subr.mxu0 0.0
    %547 = vmatpush2.msra.mxu0 %v296
    %548 = vmatprep.subr.mxu0 0.0
    %549 = vmatpush2.msra.mxu0 %v295
    %550 = vmatprep.subr.mxu0 0.0
    %551 = vmatpush2.msra.mxu0 %v294
    %552 = vmatprep.mubr.f32.mxu0 %v392
    %553 = vmatmul.mubr.f32.gmra.mxu0 %v390
    %v554 = vpop.f32.mrf.mxu0
    %v555 = vadd.f32 %v485, %v554
    %v556 = vpop.f32.mrf.mxu0
    %557 = vdwg.mxu0
    %558 = vmatprep.subr.mxu0 0.0
    %559 = vmatpush1.msra.mxu0 %v325
    %560 = vmatprep.subr.mxu0 0.0
    %561 = vmatpush1.msra.mxu0 %v324
    %562 = vmatprep.subr.mxu0 0.0
    %563 = vmatpush1.msra.mxu0 %v323
    %564 = vmatprep.subr.mxu0 0.0
    %565 = vmatpush1.msra.mxu0 %v322
    %566 = vmatprep.subr.mxu0 0.0
    %567 = vmatpush1.msra.mxu0 %v321
    %568 = vmatprep.subr.mxu0 0.0
    %569 = vmatpush1.msra.mxu0 %v320
    %570 = vmatprep.subr.mxu0 0.0
    %571 = vmatpush1.msra.mxu0 %v319
    %572 = vmatprep.subr.mxu0 0.0
    %573 = vmatpush1.msra.mxu0 %v318
    %574 = vmatprep.subr.mxu0 0.0
    %575 = vmatpush1.msra.mxu0 %v317
    %576 = vmatprep.subr.mxu0 0.0
    %577 = vmatpush1.msra.mxu0 %v316
    %578 = vmatprep.subr.mxu0 0.0
    %579 = vmatpush1.msra.mxu0 %v315
    %580 = vmatprep.subr.mxu0 0.0
    %581 = vmatpush1.msra.mxu0 %v314
    %582 = vmatprep.subr.mxu0 0.0
    %583 = vmatpush1.msra.mxu0 %v313
    %584 = vmatprep.subr.mxu0 0.0
    %585 = vmatpush1.msra.mxu0 %v312
    %586 = vmatprep.subr.mxu0 0.0
    %587 = vmatpush1.msra.mxu0 %v311
    %588 = vmatprep.subr.mxu0 0.0
    %589 = vmatpush1.msra.mxu0 %v310
    %590 = vmatprep.subr.mxu0 0.0
    %591 = vmatpush2.msra.mxu0 %v341
    %592 = vmatprep.subr.mxu0 0.0
    %593 = vmatpush2.msra.mxu0 %v340
    %594 = vmatprep.subr.mxu0 0.0
    %595 = vmatpush2.msra.mxu0 %v339
    %596 = vmatprep.subr.mxu0 0.0
    %597 = vmatpush2.msra.mxu0 %v338
    %598 = vmatprep.subr.mxu0 0.0
    %599 = vmatpush2.msra.mxu0 %v337
    %600 = vmatprep.subr.mxu0 0.0
    %601 = vmatpush2.msra.mxu0 %v336
    %602 = vmatprep.subr.mxu0 0.0
    %603 = vmatpush2.msra.mxu0 %v335
    %604 = vmatprep.subr.mxu0 0.0
    %605 = vmatpush2.msra.mxu0 %v334
    %606 = vmatprep.subr.mxu0 0.0
    %607 = vmatpush2.msra.mxu0 %v333
    %608 = vmatprep.subr.mxu0 0.0
    %609 = vmatpush2.msra.mxu0 %v332
    %610 = vmatprep.subr.mxu0 0.0
    %611 = vmatpush2.msra.mxu0 %v331
    %612 = vmatprep.subr.mxu0 0.0
    %613 = vmatpush2.msra.mxu0 %v330
    %614 = vmatprep.subr.mxu0 0.0
    %615 = vmatpush2.msra.mxu0 %v329
    %616 = vmatprep.subr.mxu0 0.0
    %617 = vmatpush2.msra.mxu0 %v328
    %618 = vmatprep.subr.mxu0 0.0
    %619 = vmatpush2.msra.mxu0 %v327
    %620 = vmatprep.subr.mxu0 0.0
    %621 = vmatpush2.msra.mxu0 %v326
    %622 = vmatprep.mubr.f32.mxu0 %v408
    %623 = vmatmul.mubr.f32.gmra.mxu0 %v400
    %v624 = vpop.f32.mrf.mxu0
    %v625 = vadd.f32 %v555, %v624
    %v626 = vpop.f32.mrf.mxu0
    %627 = vdwg.mxu0
    %628 = vmatprep.subr.mxu0 0.0
    %629 = vmatpush1.msra.mxu0 %v357
    %630 = vmatprep.subr.mxu0 0.0
    %631 = vmatpush1.msra.mxu0 %v356
    %632 = vmatprep.subr.mxu0 0.0
    %633 = vmatpush1.msra.mxu0 %v355
    %634 = vmatprep.subr.mxu0 0.0
    %635 = vmatpush1.msra.mxu0 %v354
    %636 = vmatprep.subr.mxu0 0.0
    %637 = vmatpush1.msra.mxu0 %v353
    %638 = vmatprep.subr.mxu0 0.0
    %639 = vmatpush1.msra.mxu0 %v352
    %640 = vmatprep.subr.mxu0 0.0
    %641 = vmatpush1.msra.mxu0 %v351
    %642 = vmatprep.subr.mxu0 0.0
    %643 = vmatpush1.msra.mxu0 %v350
    %644 = vmatprep.subr.mxu0 0.0
    %645 = vmatpush1.msra.mxu0 %v349
    %646 = vmatprep.subr.mxu0 0.0
    %647 = vmatpush1.msra.mxu0 %v348
    %648 = vmatprep.subr.mxu0 0.0
    %649 = vmatpush1.msra.mxu0 %v347
    %650 = vmatprep.subr.mxu0 0.0
    %651 = vmatpush1.msra.mxu0 %v346
    %652 = vmatprep.subr.mxu0 0.0
    %653 = vmatpush1.msra.mxu0 %v345
    %654 = vmatprep.subr.mxu0 0.0
    %655 = vmatpush1.msra.mxu0 %v344
    %656 = vmatprep.subr.mxu0 0.0
    %657 = vmatpush1.msra.mxu0 %v343
    %658 = vmatprep.subr.mxu0 0.0
    %659 = vmatpush1.msra.mxu0 %v342
    %660 = vmatprep.subr.mxu0 0.0
    %661 = vmatpush2.msra.mxu0 %v373
    %662 = vmatprep.subr.mxu0 0.0
    %663 = vmatpush2.msra.mxu0 %v372
    %664 = vmatprep.subr.mxu0 0.0
    %665 = vmatpush2.msra.mxu0 %v371
    %666 = vmatprep.subr.mxu0 0.0
    %667 = vmatpush2.msra.mxu0 %v370
    %668 = vmatprep.subr.mxu0 0.0
    %669 = vmatpush2.msra.mxu0 %v369
    %670 = vmatprep.subr.mxu0 0.0
    %671 = vmatpush2.msra.mxu0 %v368
    %672 = vmatprep.subr.mxu0 0.0
    %673 = vmatpush2.msra.mxu0 %v367
    %674 = vmatprep.subr.mxu0 0.0
    %675 = vmatpush2.msra.mxu0 %v366
    %676 = vmatprep.subr.mxu0 0.0
    %677 = vmatpush2.msra.mxu0 %v365
    %678 = vmatprep.subr.mxu0 0.0
    %679 = vmatpush2.msra.mxu0 %v364
    %680 = vmatprep.subr.mxu0 0.0
    %681 = vmatpush2.msra.mxu0 %v363
    %682 = vmatprep.subr.mxu0 0.0
    %683 = vmatpush2.msra.mxu0 %v362
    %684 = vmatprep.subr.mxu0 0.0
    %685 = vmatpush2.msra.mxu0 %v361
    %686 = vmatprep.subr.mxu0 0.0
    %687 = vmatpush2.msra.mxu0 %v360
    %688 = vmatprep.subr.mxu0 0.0
    %689 = vmatpush2.msra.mxu0 %v359
    %690 = vmatprep.subr.mxu0 0.0
    %691 = vmatpush2.msra.mxu0 %v358
    %692 = vmatprep.mubr.f32.mxu0 %v409
    %693 = vmatmul.mubr.f32.gmra.mxu0 %v407
    %v694 = vpop.f32.mrf.mxu0
    %v695 = vadd.f32 %v625, %v694
    %v696 = vpop.f32.mrf.mxu0
    %697 = vdwg.mxu0
    %v698 = vadd.f32 %v245, %v695
    %699 = vst [vmem:[#allocation2] sm:$0x3] %v698
    // Predicated region
    $region54: #{tpu_custom_call.1} parent=1 // pred_check
      %p700 = pneg %p92
    $region55: #{tpu_custom_call.1} parent=1 // pred_check_branch
      %702 = sbr.rel (%p700) target = $region57
    $region56: #{tpu_custom_call.1} parent=1 // pred_region
      %v703 = vld [vmem:[#allocation2] sm:$0x3]
      %v704 = vld [vmem:[%s4] sm:$0x1]
      %v706 = vlaneseq
      %v707 = vshrl.u32 %v706, 7
      %v708 = vsub.s32 0, %v707
      %v709 = vrot.slane %v704, %v708
      %v711 = vadd.f32 %v703, %v709
      %v712 = vmax.f32 %v711, 0.0
      %v713 = vld [vmem:[#allocation11] sm:$0xff]
      %v714 = vld [vmem:[#allocation11 + $0x8] sm:$0xff]
      %v715 = vld [vmem:[#allocation11 + $0x10] sm:$0xff]
      %v716 = vld [vmem:[#allocation11 + $0x18] sm:$0xff]
      %v717 = vld [vmem:[#allocation11 + $0x20] sm:$0xff]
      %v718 = vld [vmem:[#allocation11 + $0x28] sm:$0xff]
      %v719 = vld [vmem:[#allocation11 + $0x30] sm:$0xff]
      %v720 = vld [vmem:[#allocation11 + $0x38] sm:$0xff]
      %v721 = vld [vmem:[#allocation11 + $0x40] sm:$0xff]
      %v722 = vld [vmem:[#allocation11 + $0x48] sm:$0xff]
      %v723 = vld [vmem:[#allocation11 + $0x50] sm:$0xff]
      %v724 = vld [vmem:[#allocation11 + $0x58] sm:$0xff]
      %v725 = vld [vmem:[#allocation11 + $0x60] sm:$0xff]
      %v726 = vld [vmem:[#allocation11 + $0x68] sm:$0xff]
      %v727 = vld [vmem:[#allocation11 + $0x70] sm:$0xff]
      %v728 = vld [vmem:[#allocation11 + $0x78] sm:$0xff]
      %v729 = vld [vmem:[%s6] sm:$0x1]
      %v731 = vlaneseq
      %v732 = vshrl.u32 %v731, 7
      %v733 = vsub.s32 0, %v732
      %v734 = vrot.slane %v729, %v733
      %736 = vmatprep.subr.mxu0 0.0
      %737 = vmatpush1.msra.mxu0 %v728
      %738 = vmatprep.subr.mxu0 0.0
      %739 = vmatpush1.msra.mxu0 %v727
      %740 = vmatprep.subr.mxu0 0.0
      %741 = vmatpush1.msra.mxu0 %v726
      %742 = vmatprep.subr.mxu0 0.0
      %743 = vmatpush1.msra.mxu0 %v725
      %744 = vmatprep.subr.mxu0 0.0
      %745 = vmatpush1.msra.mxu0 %v724
      %746 = vmatprep.subr.mxu0 0.0
      %747 = vmatpush1.msra.mxu0 %v723
      %748 = vmatprep.subr.mxu0 0.0
      %749 = vmatpush1.msra.mxu0 %v722
      %750 = vmatprep.subr.mxu0 0.0
      %751 = vmatpush1.msra.mxu0 %v721
      %752 = vmatprep.subr.mxu0 0.0
      %753 = vmatpush1.msra.mxu0 %v720
      %754 = vmatprep.subr.mxu0 0.0
      %755 = vmatpush1.msra.mxu0 %v719
      %756 = vmatprep.subr.mxu0 0.0
      %757 = vmatpush1.msra.mxu0 %v718
      %758 = vmatprep.subr.mxu0 0.0
      %759 = vmatpush1.msra.mxu0 %v717
      %760 = vmatprep.subr.mxu0 0.0
      %761 = vmatpush1.msra.mxu0 %v716
      %762 = vmatprep.subr.mxu0 0.0
      %763 = vmatpush1.msra.mxu0 %v715
      %764 = vmatprep.subr.mxu0 0.0
      %765 = vmatpush1.msra.mxu0 %v714
      %766 = vmatprep.subr.mxu0 0.0
      %767 = vmatpush1.msra.mxu0 %v713
      %768 = vmatprep.subr.mxu0 0.0
      %769 = vmatpush2.msra.mxu0 0.0
      %770 = vmatprep.subr.mxu0 0.0
      %771 = vmatpush2.msra.mxu0 0.0
      %772 = vmatprep.subr.mxu0 0.0
      %773 = vmatpush2.msra.mxu0 0.0
      %774 = vmatprep.subr.mxu0 0.0
      %775 = vmatpush2.msra.mxu0 0.0
      %776 = vmatprep.subr.mxu0 0.0
      %777 = vmatpush2.msra.mxu0 0.0
      %778 = vmatprep.subr.mxu0 0.0
      %779 = vmatpush2.msra.mxu0 0.0
      %780 = vmatprep.subr.mxu0 0.0
      %781 = vmatpush2.msra.mxu0 0.0
      %782 = vmatprep.subr.mxu0 0.0
      %783 = vmatpush2.msra.mxu0 0.0
      %784 = vmatprep.subr.mxu0 0.0
      %785 = vmatpush2.msra.mxu0 0.0
      %786 = vmatprep.subr.mxu0 0.0
      %787 = vmatpush2.msra.mxu0 0.0
      %788 = vmatprep.subr.mxu0 0.0
      %789 = vmatpush2.msra.mxu0 0.0
      %790 = vmatprep.subr.mxu0 0.0
      %791 = vmatpush2.msra.mxu0 0.0
      %792 = vmatprep.subr.mxu0 0.0
      %793 = vmatpush2.msra.mxu0 0.0
      %794 = vmatprep.subr.mxu0 0.0
      %795 = vmatpush2.msra.mxu0 0.0
      %796 = vmatprep.subr.mxu0 0.0
      %797 = vmatpush2.msra.mxu0 0.0
      %798 = vmatprep.subr.mxu0 0.0
      %799 = vmatpush2.msra.mxu0 0.0
      %800 = vmatprep.mubr.f32.mxu0 0.0
      %801 = vmatmul.mubr.f32.gmra.mxu0 %v712
      %v802 = vpop.f32.mrf.mxu0
      %v803 = vadd.f32 %v734, %v802
      %v804 = vpop.f32.mrf.mxu0
      %805 = vdwg.mxu0
      %806 = vst [vmem:[#allocation13] sm:$0x3] %v803
    $region57: #{tpu_custom_call.1} parent=1 // pred_fallthru
      _
    // Predicated region
    $region58: #{tpu_custom_call.1} parent=1 // pred_check
      _
    $region59: #{tpu_custom_call.1} parent=1 // pred_check_branch
      %808 = sbr.rel (0) target = $region61
    $region60: #{tpu_custom_call.1} parent=1 // pred_region
      %s810 = ssub.s32 256, 256
      %811 = vsyncadd [#allocation5], %s810
      %s813 = sshll.u32 [#allocation12], 4
      %s814 = int_to_ptr.vmem [resolvable:$true] %s813
      %816 = dma.vmem_to_hbm [thread:$0]  %s814, 256, %s7, [#allocation5]
    $region61: #{tpu_custom_call.1} parent=1 // pred_fallthru
      _
    // Predicated region
    $region62: #{tpu_custom_call.1} parent=1 // pred_check
      _
    $region63: #{tpu_custom_call.1} parent=1 // pred_check_branch
      %818 = sbr.rel (0) target = $region65
    $region64: #{tpu_custom_call.1} parent=1 // pred_region
      %s820 = ssub.s32 32, 32
      %821 = vsyncadd [#allocation14], %s820
      %s823 = sshll.u32 [#allocation13], 4
      %s824 = int_to_ptr.vmem [resolvable:$true] %s823
      %826 = dma.vmem_to_hbm [thread:$0]  %s824, 32, %s8, [#allocation14]
    $region65: #{tpu_custom_call.1} parent=1 // pred_fallthru
      _
    // Predicated region
    $region66: #{tpu_custom_call.1} parent=1 // pred_check
      _
    $region67: #{tpu_custom_call.1} parent=1 // pred_check_branch
      %828 = sbr.rel (0) target = $region69
    $region68: #{tpu_custom_call.1} parent=1 // pred_region
      %829 = dma.done [#allocation5], 256
    $region69: #{tpu_custom_call.1} parent=1 // pred_fallthru
      _
    // Predicated region
    $region70: #{tpu_custom_call.1} parent=1 // pred_check
      _
    $region71: #{tpu_custom_call.1} parent=1 // pred_check_branch
      %831 = sbr.rel (0) target = $region73
    $region72: #{tpu_custom_call.1} parent=1 // pred_region
      %832 = dma.done [#allocation14], 32
    $region73: #{tpu_custom_call.1} parent=1 // pred_fallthru
      _
    %833 = vsyncpa [#allocation4], 1
    %834 = vsyncpa [#allocation7], 1
    %835 = vsyncpa [#allocation10], 1
    %836 = vsyncpa [#allocation5], 1
    %837 = vsyncpa [#allocation14], 1

// kernel: tpu_custom_call.1
$region0: #{tpu_custom_call.1}
  #allocation0 [shape = 'u32[]', space=smem, size = 0x4, offset = 0x4, fixed_abs, tag = 'smem constant byte address 0x4 - core index']
  #allocation1 [shape = 'u32[144,128]{1,0:T(1,128)}', space=vmem, size = 0x12000, scoped, tag = 'internal scratch']
  #allocation2 [shape = 'f32[2,128]{1,0:T(2,128)}', space=vmem, size = 0x400, scoped, tag = 'scratch operand']
  %s0 = inlined_call_operand.hbm [shape: f32[2,1024], index: 0, kind: input, shape index: {}]
  %s1 = inlined_call_operand.hbm [shape: f32[1,1024], index: 1, kind: input, shape index: {}]
  %s2 = inlined_call_operand.hbm [shape: f32[1,1024], index: 2, kind: input, shape index: {}]
  %s3 = inlined_call_operand.hbm [shape: f32[1024,128], index: 3, kind: input, shape index: {}]
  %s4 = inlined_call_operand.vmem [shape: f32[1,128], index: 4, kind: input, shape index: {}]
  %s5 = inlined_call_operand.hbm [shape: f32[128,128], index: 5, kind: input, shape index: {}]
  %s6 = inlined_call_operand.vmem [shape: f32[1,128], index: 6, kind: input, shape index: {}]
  %s7 = inlined_call_operand.hbm [shape: f32[2,1024], index: 7, kind: output, shape index: {0}]
  %s8 = inlined_call_operand.hbm [shape: f32[2,128], index: 8, kind: output, shape index: {1}]
  %9 = xla_tuple %s7, %s8
  %s10 = sld [smem:[#allocation0]]
  $region74: #{tpu_custom_call.1} parent=0
    _
  %s12 = ssub.s32 1, %s10
  %s13 = scalar_select 0, %s12, %s10
  $region1: #{tpu_custom_call.1} parent=0
    #allocation3 [shape = 'u8[8192]{0}', space=vmem, size = 0x2000, scoped, tag = 'input window, operand 0, single buffered']
    #allocation4 [shape = 's32[1]{0}', space=sflag, size = 0x4, scoped, tag = 'scoped memory for tpu_custom_call.1']
    #allocation5 [shape = 's32[1]{0}', space=sflag, size = 0x4, scoped, tag = 'scoped memory for tpu_custom_call.1']
    #allocation6 [shape = 'u8[4096]{0}', space=vmem, size = 0x1000, scoped, tag = 'input window, operand 1, single buffered']
    #allocation7 [shape = 's32[1]{0}', space=sflag, size = 0x4, scoped, tag = 'scoped memory for tpu_custom_call.1']
    #allocation8 [shape = 'u8[4096]{0}', space=vmem, size = 0x1000, scoped, tag = 'input window, operand 2, single buffered']
    #allocation9 [shape = 'u8[524288]{0}', space=vmem, size = 0x80000, scoped, tag = 'input window, operand 3, single buffered']
    #allocation10 [shape = 's32[1]{0}', space=sflag, size = 0x4, scoped, tag = 'scoped memory for tpu_custom_call.1']
    #allocation11 [shape = 'u8[65536]{0}', space=vmem, size = 0x10000, scoped, tag = 'input window, operand 5, single buffered']
    #allocation12 [shape = 'u8[8192]{0}', space=vmem, size = 0x2000, scoped, tag = 'output window, operand 0, single buffered']
    #allocation13 [shape = 'u8[1024]{0}', space=vmem, size = 0x400, scoped, tag = 'output window, operand 1, single buffered']
    #allocation14 [shape = 's32[1]{0}', space=sflag, size = 0x4, scoped, tag = 'scoped memory for tpu_custom_call.1']
    %14 = vsyncpa [#allocation4], 0
    %15 = vsyncpa [#allocation7], 0
    %16 = vsyncpa [#allocation10], 0
    %17 = vsyncpa [#allocation5], 0
    %18 = vsyncpa [#allocation14], 0
    // Predicated region
    $region2: #{tpu_custom_call.1} parent=1 // pred_check
      _
    $region3: #{tpu_custom_call.1} parent=1 // pred_check_branch
      %20 = sbr.rel (0) target = $region5
    $region4: #{tpu_custom_call.1} parent=1 // pred_region
      %s22 = ssub.s32 256, 256
      %23 = vsyncadd [#allocation4], %s22
      %s25 = sshll.u32 [#allocation3], 4
      %s26 = int_to_ptr.vmem [resolvable:$true] %s25
      %28 = dma.hbm_to_vmem [thread:$0]  %s0, 256, %s26, [#allocation4]
    $region5: #{tpu_custom_call.1} parent=1 // pred_fallthru
      _
    // Predicated region
    $region6: #{tpu_custom_call.1} parent=1 // pred_check
      _
    $region7: #{tpu_custom_call.1} parent=1 // pred_check_branch
      %30 = sbr.rel (0) target = $region9
    $region8: #{tpu_custom_call.1} parent=1 // pred_region
      %s32 = ssub.s32 128, 128
      %33 = vsyncadd [#allocation7], %s32
      %s35 = sshll.u32 [#allocation6], 4
      %s36 = int_to_ptr.vmem [resolvable:$true] %s35
      %38 = dma.hbm_to_vmem [thread:$0]  %s1, 128, %s36, [#allocation7]
    $region9: #{tpu_custom_call.1} parent=1 // pred_fallthru
      _
    // Predicated region
    $region10: #{tpu_custom_call.1} parent=1 // pred_check
      _
    $region11: #{tpu_custom_call.1} parent=1 // pred_check_branch
      %40 = sbr.rel (0) target = $region13
    $region12: #{tpu_custom_call.1} parent=1 // pred_region
      %s42 = ssub.s32 128, 128
      %43 = vsyncadd [#allocation7], %s42
      %s45 = sshll.u32 [#allocation8], 4
      %s46 = int_to_ptr.vmem [resolvable:$true] %s45
      %48 = dma.hbm_to_vmem [thread:$0]  %s2, 128, %s46, [#allocation7]
    $region13: #{tpu_custom_call.1} parent=1 // pred_fallthru
      _
    // Predicated region
    $region14: #{tpu_custom_call.1} parent=1 // pred_check
      _
    $region15: #{tpu_custom_call.1} parent=1 // pred_check_branch
      %50 = sbr.rel (0) target = $region17
    $region16: #{tpu_custom_call.1} parent=1 // pred_region
      %s52 = ssub.s32 16384, 16384
      %53 = vsyncadd [#allocation10], %s52
      %s54 = sshll.u32 [#allocation9], 4
      %s55 = int_to_ptr.vmem [resolvable:$true] %s54
      %60 = dma.hbm_to_vmem [thread:$0]  %s3, 16384, %s55, [#allocation10], 128, 128, 8
    $region17: #{tpu_custom_call.1} parent=1 // pred_fallthru
      _
    // Predicated region
    $region18: #{tpu_custom_call.1} parent=1 // pred_check
      _
    $region19: #{tpu_custom_call.1} parent=1 // pred_check_branch
      %62 = sbr.rel (0) target = $region21
    $region20: #{tpu_custom_call.1} parent=1 // pred_region
      _
    $region21: #{tpu_custom_call.1} parent=1 // pred_fallthru
      _
    // Predicated region
    $region22: #{tpu_custom_call.1} parent=1 // pred_check
      _
    $region23: #{tpu_custom_call.1} parent=1 // pred_check_branch
      %64 = sbr.rel (0) target = $region25
    $region24: #{tpu_custom_call.1} parent=1 // pred_region
      %s66 = ssub.s32 2048, 2048
      %67 = vsyncadd [#allocation10], %s66
      %s68 = sshll.u32 [#allocation11], 4
      %s69 = int_to_ptr.vmem [resolvable:$true] %s68
      %74 = dma.hbm_to_vmem [thread:$0]  %s5, 2048, %s69, [#allocation10], 128, 128, 8
    $region25: #{tpu_custom_call.1} parent=1 // pred_fallthru
      _
    // Predicated region
    $region26: #{tpu_custom_call.1} parent=1 // pred_check
      _
    $region27: #{tpu_custom_call.1} parent=1 // pred_check_branch
      %76 = sbr.rel (0) target = $region29
    $region28: #{tpu_custom_call.1} parent=1 // pred_region
      _
    $region29: #{tpu_custom_call.1} parent=1 // pred_fallthru
      _
    // Predicated region
    $region30: #{tpu_custom_call.1} parent=1 // pred_check
      _
    $region31: #{tpu_custom_call.1} parent=1 // pred_check_branch
      %78 = sbr.rel (0) target = $region33
    $region32: #{tpu_custom_call.1} parent=1 // pred_region
      %79 = dma.done [#allocation4], 256
    $region33: #{tpu_custom_call.1} parent=1 // pred_fallthru
      _
    // Predicated region
    $region34: #{tpu_custom_call.1} parent=1 // pred_check
      _
    $region35: #{tpu_custom_call.1} parent=1 // pred_check_branch
      %81 = sbr.rel (0) target = $region37
    $region36: #{tpu_custom_call.1} parent=1 // pred_region
      %82 = dma.done [#allocation7], 128
    $region37: #{tpu_custom_call.1} parent=1 // pred_fallthru
      _
    // Predicated region
    $region38: #{tpu_custom_call.1} parent=1 // pred_check
      _
    $region39: #{tpu_custom_call.1} parent=1 // pred_check_branch
      %84 = sbr.rel (0) target = $region41
    $region40: #{tpu_custom_call.1} parent=1 // pred_region
      %85 = dma.done [#allocation7], 128
    $region41: #{tpu_custom_call.1} parent=1 // pred_fallthru
      _
    // Predicated region
    $region42: #{tpu_custom_call.1} parent=1 // pred_check
      _
    $region43: #{tpu_custom_call.1} parent=1 // pred_check_branch
      %87 = sbr.rel (0) target = $region45
    $region44: #{tpu_custom_call.1} parent=1 // pred_region
      %88 = dma.done [#allocation10], 16384
    $region45: #{tpu_custom_call.1} parent=1 // pred_fallthru
      _
    // Predicated region
    $region46: #{tpu_custom_call.1} parent=1 // pred_check
      _
    $region47: #{tpu_custom_call.1} parent=1 // pred_check_branch
      %90 = sbr.rel (0) target = $region49
    $region48: #{tpu_custom_call.1} parent=1 // pred_region
      %91 = dma.done [#allocation10], 2048
    $region49: #{tpu_custom_call.1} parent=1 // pred_fallthru
      _
    %p92 = scmp.eq.s32.totalorder 0, 0
    // Predicated region
    $region50: #{tpu_custom_call.1} parent=1 // pred_check
      %p93 = pneg %p92
    $region51: #{tpu_custom_call.1} parent=1 // pred_check_branch
      %95 = sbr.rel (%p93) target = $region53
    $region52: #{tpu_custom_call.1} parent=1 // pred_region
      %96 = vst [vmem:[#allocation2] sm:$0x3] 0.0
    $region53: #{tpu_custom_call.1} parent=1 // pred_fallthru
      _
    %v97 = vld [vmem:[#allocation3] sm:$0xff]
    %v98 = vld [vmem:[#allocation3 + $0x8] sm:$0xff]
    %v99 = vld [vmem:[#allocation6] sm:$0xff]
    %v101 = vlaneseq
    %v102 = vshrl.u32 %v101, 7
    %v103 = vsub.s32 0, %v102
    %v104 = vrot.slane %v99, %v103
    %v105 = vlaneseq
    %v106 = vshrl.u32 %v105, 7
    %v107 = vsub.s32 1, %v106
    %v108 = vrot.slane %v99, %v107
    %v109 = vlaneseq
    %v110 = vshrl.u32 %v109, 7
    %v111 = vsub.s32 2, %v110
    %v112 = vrot.slane %v99, %v111
    %v113 = vlaneseq
    %v114 = vshrl.u32 %v113, 7
    %v115 = vsub.s32 3, %v114
    %v116 = vrot.slane %v99, %v115
    %v117 = vlaneseq
    %v118 = vshrl.u32 %v117, 7
    %v119 = vsub.s32 4, %v118
    %v120 = vrot.slane %v99, %v119
    %v121 = vlaneseq
    %v122 = vshrl.u32 %v121, 7
    %v123 = vsub.s32 5, %v122
    %v124 = vrot.slane %v99, %v123
    %v125 = vlaneseq
    %v126 = vshrl.u32 %v125, 7
    %v127 = vsub.s32 6, %v126
    %v128 = vrot.slane %v99, %v127
    %v129 = vlaneseq
    %v130 = vshrl.u32 %v129, 7
    %v131 = vsub.s32 7, %v130
    %v132 = vrot.slane %v99, %v131
    %v133 = vcombine.low %v104, %v108
    %v134 = vcombine.low %v112, %v116
    %v136 = vunpack.c.l.s4 1983009808
    %v137 = vunpack.c.0.s8 %v136
    %v138 = vlaneseq
    %v139 = vshrl.u32 %v138, 7
    %v140 = vsub.s32 %v137, %v139
    %v141 = vrot.slane %v133, %v140
    %v143 = vunpack.c.l.s4 1983009808
    %v144 = vunpack.c.0.s8 %v143
    %v145 = vlaneseq
    %v146 = vshrl.u32 %v145, 7
    %v147 = vsub.s32 %v144, %v146
    %v148 = vrot.slane %v134, %v147
    %v149 = vcombine.low %v141, %v148
    %v150 = vcombine.low %v120, %v124
    %v151 = vcombine.low %v128, %v132
    %v153 = vunpack.c.l.s4 1983009808
    %v154 = vunpack.c.0.s8 %v153
    %v155 = vlaneseq
    %v156 = vshrl.u32 %v155, 7
    %v157 = vsub.s32 %v154, %v156
    %v158 = vrot.slane %v150, %v157
    %v160 = vunpack.c.l.s4 1983009808
    %v161 = vunpack.c.0.s8 %v160
    %v162 = vlaneseq
    %v163 = vshrl.u32 %v162, 7
    %v164 = vsub.s32 %v161, %v163
    %v165 = vrot.slane %v151, %v164
    %v166 = vcombine.low %v158, %v165
    %v169 = vmul.f32 %v97, %v149
    %v170 = vmul.f32 %v98, %v166
    %v171 = vld [vmem:[#allocation8] sm:$0xff]
    %v173 = vlaneseq
    %v174 = vshrl.u32 %v173, 7
    %v175 = vsub.s32 0, %v174
    %v176 = vrot.slane %v171, %v175
    %v177 = vlaneseq
    %v178 = vshrl.u32 %v177, 7
    %v179 = vsub.s32 1, %v178
    %v180 = vrot.slane %v171, %v179
    %v181 = vlaneseq
    %v182 = vshrl.u32 %v181, 7
    %v183 = vsub.s32 2, %v182
    %v184 = vrot.slane %v171, %v183
    %v185 = vlaneseq
    %v186 = vshrl.u32 %v185, 7
    %v187 = vsub.s32 3, %v186
    %v188 = vrot.slane %v171, %v187
    %v189 = vlaneseq
    %v190 = vshrl.u32 %v189, 7
    %v191 = vsub.s32 4, %v190
    %v192 = vrot.slane %v171, %v191
    %v193 = vlaneseq
    %v194 = vshrl.u32 %v193, 7
    %v195 = vsub.s32 5, %v194
    %v196 = vrot.slane %v171, %v195
    %v197 = vlaneseq
    %v198 = vshrl.u32 %v197, 7
    %v199 = vsub.s32 6, %v198
    %v200 = vrot.slane %v171, %v199
    %v201 = vlaneseq
    %v202 = vshrl.u32 %v201, 7
    %v203 = vsub.s32 7, %v202
    %v204 = vrot.slane %v171, %v203
    %v205 = vcombine.low %v176, %v180
    %v206 = vcombine.low %v184, %v188
    %v208 = vunpack.c.l.s4 1983009808
    %v209 = vunpack.c.0.s8 %v208
    %v210 = vlaneseq
    %v211 = vshrl.u32 %v210, 7
    %v212 = vsub.s32 %v209, %v211
    %v213 = vrot.slane %v205, %v212
    %v215 = vunpack.c.l.s4 1983009808
    %v216 = vunpack.c.0.s8 %v215
    %v217 = vlaneseq
    %v218 = vshrl.u32 %v217, 7
    %v219 = vsub.s32 %v216, %v218
    %v220 = vrot.slane %v206, %v219
    %v221 = vcombine.low %v213, %v220
    %v222 = vcombine.low %v192, %v196
    %v223 = vcombine.low %v200, %v204
    %v225 = vunpack.c.l.s4 1983009808
    %v226 = vunpack.c.0.s8 %v225
    %v227 = vlaneseq
    %v228 = vshrl.u32 %v227, 7
    %v229 = vsub.s32 %v226, %v228
    %v230 = vrot.slane %v222, %v229
    %v232 = vunpack.c.l.s4 1983009808
    %v233 = vunpack.c.0.s8 %v232
    %v234 = vlaneseq
    %v235 = vshrl.u32 %v234, 7
    %v236 = vsub.s32 %v233, %v235
    %v237 = vrot.slane %v223, %v236
    %v238 = vcombine.low %v230, %v237
    %v241 = vadd.f32 %v169, %v221
    %v242 = vadd.f32 %v170, %v238
    %243 = vst [vmem:[#allocation12] sm:$0xff] %v241
    %244 = vst [vmem:[#allocation12 + $0x8] sm:$0xff] %v242
    %v245 = vld [vmem:[#allocation2] sm:$0x3]
    %v246 = vld [vmem:[#allocation9] sm:$0xff]
    %v247 = vld [vmem:[#allocation9 + $0x8] sm:$0xff]
    %v248 = vld [vmem:[#allocation9 + $0x10] sm:$0xff]
    %v249 = vld [vmem:[#allocation9 + $0x18] sm:$0xff]
    %v250 = vld [vmem:[#allocation9 + $0x20] sm:$0xff]
    %v251 = vld [vmem:[#allocation9 + $0x28] sm:$0xff]
    %v252 = vld [vmem:[#allocation9 + $0x30] sm:$0xff]
    %v253 = vld [vmem:[#allocation9 + $0x38] sm:$0xff]
    %v254 = vld [vmem:[#allocation9 + $0x40] sm:$0xff]
    %v255 = vld [vmem:[#allocation9 + $0x48] sm:$0xff]
    %v256 = vld [vmem:[#allocation9 + $0x50] sm:$0xff]
    %v257 = vld [vmem:[#allocation9 + $0x58] sm:$0xff]
    %v258 = vld [vmem:[#allocation9 + $0x60] sm:$0xff]
    %v259 = vld [vmem:[#allocation9 + $0x68] sm:$0xff]
    %v260 = vld [vmem:[#allocation9 + $0x70] sm:$0xff]
    %v261 = vld [vmem:[#allocation9 + $0x78] sm:$0xff]
    %v262 = vld [vmem:[#allocation9 + $0x80] sm:$0xff]
    %v263 = vld [vmem:[#allocation9 + $0x88] sm:$0xff]
    %v264 = vld [vmem:[#allocation9 + $0x90] sm:$0xff]
    %v265 = vld [vmem:[#allocation9 + $0x98] sm:$0xff]
    %v266 = vld [vmem:[#allocation9 + $0xa0] sm:$0xff]
    %v267 = vld [vmem:[#allocation9 + $0xa8] sm:$0xff]
    %v268 = vld [vmem:[#allocation9 + $0xb0] sm:$0xff]
    %v269 = vld [vmem:[#allocation9 + $0xb8] sm:$0xff]
    %v270 = vld [vmem:[#allocation9 + $0xc0] sm:$0xff]
    %v271 = vld [vmem:[#allocation9 + $0xc8] sm:$0xff]
    %v272 = vld [vmem:[#allocation9 + $0xd0] sm:$0xff]
    %v273 = vld [vmem:[#allocation9 + $0xd8] sm:$0xff]
    %v274 = vld [vmem:[#allocation9 + $0xe0] sm:$0xff]
    %v275 = vld [vmem:[#allocation9 + $0xe8] sm:$0xff]
    %v276 = vld [vmem:[#allocation9 + $0xf0] sm:$0xff]
    %v277 = vld [vmem:[#allocation9 + $0xf8] sm:$0xff]
    %v278 = vld [vmem:[#allocation9 + $0x100] sm:$0xff]
    %v279 = vld [vmem:[#allocation9 + $0x108] sm:$0xff]
    %v280 = vld [vmem:[#allocation9 + $0x110] sm:$0xff]
    %v281 = vld [vmem:[#allocation9 + $0x118] sm:$0xff]
    %v282 = vld [vmem:[#allocation9 + $0x120] sm:$0xff]
    %v283 = vld [vmem:[#allocation9 + $0x128] sm:$0xff]
    %v284 = vld [vmem:[#allocation9 + $0x130] sm:$0xff]
    %v285 = vld [vmem:[#allocation9 + $0x138] sm:$0xff]
    %v286 = vld [vmem:[#allocation9 + $0x140] sm:$0xff]
    %v287 = vld [vmem:[#allocation9 + $0x148] sm:$0xff]
    %v288 = vld [vmem:[#allocation9 + $0x150] sm:$0xff]
    %v289 = vld [vmem:[#allocation9 + $0x158] sm:$0xff]
    %v290 = vld [vmem:[#allocation9 + $0x160] sm:$0xff]
    %v291 = vld [vmem:[#allocation9 + $0x168] sm:$0xff]
    %v292 = vld [vmem:[#allocation9 + $0x170] sm:$0xff]
    %v293 = vld [vmem:[#allocation9 + $0x178] sm:$0xff]
    %v294 = vld [vmem:[#allocation9 + $0x180] sm:$0xff]
    %v295 = vld [vmem:[#allocation9 + $0x188] sm:$0xff]
    %v296 = vld [vmem:[#allocation9 + $0x190] sm:$0xff]
    %v297 = vld [vmem:[#allocation9 + $0x198] sm:$0xff]
    %v298 = vld [vmem:[#allocation9 + $0x1a0] sm:$0xff]
    %v299 = vld [vmem:[#allocation9 + $0x1a8] sm:$0xff]
    %v300 = vld [vmem:[#allocation9 + $0x1b0] sm:$0xff]
    %v301 = vld [vmem:[#allocation9 + $0x1b8] sm:$0xff]
    %v302 = vld [vmem:[#allocation9 + $0x1c0] sm:$0xff]
    %v303 = vld [vmem:[#allocation9 + $0x1c8] sm:$0xff]
    %v304 = vld [vmem:[#allocation9 + $0x1d0] sm:$0xff]
    %v305 = vld [vmem:[#allocation9 + $0x1d8] sm:$0xff]
    %v306 = vld [vmem:[#allocation9 + $0x1e0] sm:$0xff]
    %v307 = vld [vmem:[#allocation9 + $0x1e8] sm:$0xff]
    %v308 = vld [vmem:[#allocation9 + $0x1f0] sm:$0xff]
    %v309 = vld [vmem:[#allocation9 + $0x1f8] sm:$0xff]
    %v310 = vld [vmem:[#allocation9 + $0x200] sm:$0xff]
    %v311 = vld [vmem:[#allocation9 + $0x208] sm:$0xff]
    %v312 = vld [vmem:[#allocation9 + $0x210] sm:$0xff]
    %v313 = vld [vmem:[#allocation9 + $0x218] sm:$0xff]
    %v314 = vld [vmem:[#allocation9 + $0x220] sm:$0xff]
    %v315 = vld [vmem:[#allocation9 + $0x228] sm:$0xff]
    %v316 = vld [vmem:[#allocation9 + $0x230] sm:$0xff]
    %v317 = vld [vmem:[#allocation9 + $0x238] sm:$0xff]
    %v318 = vld [vmem:[#allocation9 + $0x240] sm:$0xff]
    %v319 = vld [vmem:[#allocation9 + $0x248] sm:$0xff]
    %v320 = vld [vmem:[#allocation9 + $0x250] sm:$0xff]
    %v321 = vld [vmem:[#allocation9 + $0x258] sm:$0xff]
    %v322 = vld [vmem:[#allocation9 + $0x260] sm:$0xff]
    %v323 = vld [vmem:[#allocation9 + $0x268] sm:$0xff]
    %v324 = vld [vmem:[#allocation9 + $0x270] sm:$0xff]
    %v325 = vld [vmem:[#allocation9 + $0x278] sm:$0xff]
    %v326 = vld [vmem:[#allocation9 + $0x280] sm:$0xff]
    %v327 = vld [vmem:[#allocation9 + $0x288] sm:$0xff]
    %v328 = vld [vmem:[#allocation9 + $0x290] sm:$0xff]
    %v329 = vld [vmem:[#allocation9 + $0x298] sm:$0xff]
    %v330 = vld [vmem:[#allocation9 + $0x2a0] sm:$0xff]
    %v331 = vld [vmem:[#allocation9 + $0x2a8] sm:$0xff]
    %v332 = vld [vmem:[#allocation9 + $0x2b0] sm:$0xff]
    %v333 = vld [vmem:[#allocation9 + $0x2b8] sm:$0xff]
    %v334 = vld [vmem:[#allocation9 + $0x2c0] sm:$0xff]
    %v335 = vld [vmem:[#allocation9 + $0x2c8] sm:$0xff]
    %v336 = vld [vmem:[#allocation9 + $0x2d0] sm:$0xff]
    %v337 = vld [vmem:[#allocation9 + $0x2d8] sm:$0xff]
    %v338 = vld [vmem:[#allocation9 + $0x2e0] sm:$0xff]
    %v339 = vld [vmem:[#allocation9 + $0x2e8] sm:$0xff]
    %v340 = vld [vmem:[#allocation9 + $0x2f0] sm:$0xff]
    %v341 = vld [vmem:[#allocation9 + $0x2f8] sm:$0xff]
    %v342 = vld [vmem:[#allocation9 + $0x300] sm:$0xff]
    %v343 = vld [vmem:[#allocation9 + $0x308] sm:$0xff]
    %v344 = vld [vmem:[#allocation9 + $0x310] sm:$0xff]
    %v345 = vld [vmem:[#allocation9 + $0x318] sm:$0xff]
    %v346 = vld [vmem:[#allocation9 + $0x320] sm:$0xff]
    %v347 = vld [vmem:[#allocation9 + $0x328] sm:$0xff]
    %v348 = vld [vmem:[#allocation9 + $0x330] sm:$0xff]
    %v349 = vld [vmem:[#allocation9 + $0x338] sm:$0xff]
    %v350 = vld [vmem:[#allocation9 + $0x340] sm:$0xff]
    %v351 = vld [vmem:[#allocation9 + $0x348] sm:$0xff]
    %v352 = vld [vmem:[#allocation9 + $0x350] sm:$0xff]
    %v353 = vld [vmem:[#allocation9 + $0x358] sm:$0xff]
    %v354 = vld [vmem:[#allocation9 + $0x360] sm:$0xff]
    %v355 = vld [vmem:[#allocation9 + $0x368] sm:$0xff]
    %v356 = vld [vmem:[#allocation9 + $0x370] sm:$0xff]
    %v357 = vld [vmem:[#allocation9 + $0x378] sm:$0xff]
    %v358 = vld [vmem:[#allocation9 + $0x380] sm:$0xff]
    %v359 = vld [vmem:[#allocation9 + $0x388] sm:$0xff]
    %v360 = vld [vmem:[#allocation9 + $0x390] sm:$0xff]
    %v361 = vld [vmem:[#allocation9 + $0x398] sm:$0xff]
    %v362 = vld [vmem:[#allocation9 + $0x3a0] sm:$0xff]
    %v363 = vld [vmem:[#allocation9 + $0x3a8] sm:$0xff]
    %v364 = vld [vmem:[#allocation9 + $0x3b0] sm:$0xff]
    %v365 = vld [vmem:[#allocation9 + $0x3b8] sm:$0xff]
    %v366 = vld [vmem:[#allocation9 + $0x3c0] sm:$0xff]
    %v367 = vld [vmem:[#allocation9 + $0x3c8] sm:$0xff]
    %v368 = vld [vmem:[#allocation9 + $0x3d0] sm:$0xff]
    %v369 = vld [vmem:[#allocation9 + $0x3d8] sm:$0xff]
    %v370 = vld [vmem:[#allocation9 + $0x3e0] sm:$0xff]
    %v371 = vld [vmem:[#allocation9 + $0x3e8] sm:$0xff]
    %v372 = vld [vmem:[#allocation9 + $0x3f0] sm:$0xff]
    %v373 = vld [vmem:[#allocation9 + $0x3f8] sm:$0xff]
    %v376 = vcombine.high %v241, %v241
    %v378 = vunpack.c.l.s4 1983009808
    %v379 = vunpack.c.0.s8 %v378
    %v380 = vlaneseq
    %v381 = vshrl.u32 %v380, 7
    %v382 = vsub.s32 %v379, %v381
    %v383 = vrot.slane %v241, %v382
    %v385 = vunpack.c.l.s4 1983009808
    %v386 = vunpack.c.0.s8 %v385
    %v387 = vlaneseq
    %v388 = vshrl.u32 %v387, 7
    %v389 = vsub.s32 %v386, %v388
    %v390 = vrot.slane %v376, %v389
    %v391 = vcombine.high %v383, %v383
    %v392 = vcombine.high %v390, %v390
    %v393 = vcombine.high %v242, %v242
    %v395 = vunpack.c.l.s4 1983009808
    %v396 = vunpack.c.0.s8 %v395
    %v397 = vlaneseq
    %v398 = vshrl.u32 %v397, 7
    %v399 = vsub.s32 %v396, %v398
    %v400 = vrot.slane %v242, %v399
    %v402 = vunpack.c.l.s4 1983009808
    %v403 = vunpack.c.0.s8 %v402
    %v404 = vlaneseq
    %v405 = vshrl.u32 %v404, 7
    %v406 = vsub.s32 %v403, %v405
    %v407 = vrot.slane %v393, %v406
    %v408 = vcombine.high %v400, %v400
    %v409 = vcombine.high %v407, %v407
    %418 = vmatprep.subr.mxu0 0.0
    %419 = vmatpush1.msra.mxu0 %v261
    %420 = vmatprep.subr.mxu0 0.0
    %421 = vmatpush1.msra.mxu0 %v260
    %422 = vmatprep.subr.mxu0 0.0
    %423 = vmatpush1.msra.mxu0 %v259
    %424 = vmatprep.subr.mxu0 0.0
    %425 = vmatpush1.msra.mxu0 %v258
    %426 = vmatprep.subr.mxu0 0.0
    %427 = vmatpush1.msra.mxu0 %v257
    %428 = vmatprep.subr.mxu0 0.0
    %429 = vmatpush1.msra.mxu0 %v256
    %430 = vmatprep.subr.mxu0 0.0
    %431 = vmatpush1.msra.mxu0 %v255
    %432 = vmatprep.subr.mxu0 0.0
    %433 = vmatpush1.msra.mxu0 %v254
    %434 = vmatprep.subr.mxu0 0.0
    %435 = vmatpush1.msra.mxu0 %v253
    %436 = vmatprep.subr.mxu0 0.0
    %437 = vmatpush1.msra.mxu0 %v252
    %438 = vmatprep.subr.mxu0 0.0
    %439 = vmatpush1.msra.mxu0 %v251
    %440 = vmatprep.subr.mxu0 0.0
    %441 = vmatpush1.msra.mxu0 %v250
    %442 = vmatprep.subr.mxu0 0.0
    %443 = vmatpush1.msra.mxu0 %v249
    %444 = vmatprep.subr.mxu0 0.0
    %445 = vmatpush1.msra.mxu0 %v248
    %446 = vmatprep.subr.mxu0 0.0
    %447 = vmatpush1.msra.mxu0 %v247
    %448 = vmatprep.subr.mxu0 0.0
    %449 = vmatpush1.msra.mxu0 %v246
    %450 = vmatprep.subr.mxu0 0.0
    %451 = vmatpush2.msra.mxu0 %v277
    %452 = vmatprep.subr.mxu0 0.0
    %453 = vmatpush2.msra.mxu0 %v276
    %454 = vmatprep.subr.mxu0 0.0
    %455 = vmatpush2.msra.mxu0 %v275
    %456 = vmatprep.subr.mxu0 0.0
    %457 = vmatpush2.msra.mxu0 %v274
    %458 = vmatprep.subr.mxu0 0.0
    %459 = vmatpush2.msra.mxu0 %v273
    %460 = vmatprep.subr.mxu0 0.0
    %461 = vmatpush2.msra.mxu0 %v272
    %462 = vmatprep.subr.mxu0 0.0
    %463 = vmatpush2.msra.mxu0 %v271
    %464 = vmatprep.subr.mxu0 0.0
    %465 = vmatpush2.msra.mxu0 %v270
    %466 = vmatprep.subr.mxu0 0.0
    %467 = vmatpush2.msra.mxu0 %v269
    %468 = vmatprep.subr.mxu0 0.0
    %469 = vmatpush2.msra.mxu0 %v268
    %470 = vmatprep.subr.mxu0 0.0
    %471 = vmatpush2.msra.mxu0 %v267
    %472 = vmatprep.subr.mxu0 0.0
    %473 = vmatpush2.msra.mxu0 %v266
    %474 = vmatprep.subr.mxu0 0.0
    %475 = vmatpush2.msra.mxu0 %v265
    %476 = vmatprep.subr.mxu0 0.0
    %477 = vmatpush2.msra.mxu0 %v264
    %478 = vmatprep.subr.mxu0 0.0
    %479 = vmatpush2.msra.mxu0 %v263
    %480 = vmatprep.subr.mxu0 0.0
    %481 = vmatpush2.msra.mxu0 %v262
    %482 = vmatprep.mubr.f32.mxu0 %v391
    %483 = vmatmul.mubr.f32.gmra.mxu0 %v383
    %v484 = vpop.f32.mrf.mxu0
    %v485 = vadd.f32 0.0, %v484
    %v486 = vpop.f32.mrf.mxu0
    %487 = vdwg.mxu0
    %488 = vmatprep.subr.mxu0 0.0
    %489 = vmatpush1.msra.mxu0 %v293
    %490 = vmatprep.subr.mxu0 0.0
    %491 = vmatpush1.msra.mxu0 %v292
    %492 = vmatprep.subr.mxu0 0.0
    %493 = vmatpush1.msra.mxu0 %v291
    %494 = vmatprep.subr.mxu0 0.0
    %495 = vmatpush1.msra.mxu0 %v290
    %496 = vmatprep.subr.mxu0 0.0
    %497 = vmatpush1.msra.mxu0 %v289
    %498 = vmatprep.subr.mxu0 0.0
    %499 = vmatpush1.msra.mxu0 %v288
    %500 = vmatprep.subr.mxu0 0.0
    %501 = vmatpush1.msra.mxu0 %v287
    %502 = vmatprep.subr.mxu0 0.0
    %503 = vmatpush1.msra.mxu0 %v286
    %504 = vmatprep.subr.mxu0 0.0
    %505 = vmatpush1.msra.mxu0 %v285
    %506 = vmatprep.subr.mxu0 0.0
    %507 = vmatpush1.msra.mxu0 %v284
    %508 = vmatprep.subr.mxu0 0.0
    %509 = vmatpush1.msra.mxu0 %v283
    %510 = vmatprep.subr.mxu0 0.0
    %511 = vmatpush1.msra.mxu0 %v282
    %512 = vmatprep.subr.mxu0 0.0
    %513 = vmatpush1.msra.mxu0 %v281
    %514 = vmatprep.subr.mxu0 0.0
    %515 = vmatpush1.msra.mxu0 %v280
    %516 = vmatprep.subr.mxu0 0.0
    %517 = vmatpush1.msra.mxu0 %v279
    %518 = vmatprep.subr.mxu0 0.0
    %519 = vmatpush1.msra.mxu0 %v278
    %520 = vmatprep.subr.mxu0 0.0
    %521 = vmatpush2.msra.mxu0 %v309
    %522 = vmatprep.subr.mxu0 0.0
    %523 = vmatpush2.msra.mxu0 %v308
    %524 = vmatprep.subr.mxu0 0.0
    %525 = vmatpush2.msra.mxu0 %v307
    %526 = vmatprep.subr.mxu0 0.0
    %527 = vmatpush2.msra.mxu0 %v306
    %528 = vmatprep.subr.mxu0 0.0
    %529 = vmatpush2.msra.mxu0 %v305
    %530 = vmatprep.subr.mxu0 0.0
    %531 = vmatpush2.msra.mxu0 %v304
    %532 = vmatprep.subr.mxu0 0.0
    %533 = vmatpush2.msra.mxu0 %v303
    %534 = vmatprep.subr.mxu0 0.0
    %535 = vmatpush2.msra.mxu0 %v302
    %536 = vmatprep.subr.mxu0 0.0
    %537 = vmatpush2.msra.mxu0 %v301
    %538 = vmatprep.subr.mxu0 0.0
    %539 = vmatpush2.msra.mxu0 %v300
    %540 = vmatprep.subr.mxu0 0.0
    %541 = vmatpush2.msra.mxu0 %v299
    %542 = vmatprep.subr.mxu0 0.0
    %543 = vmatpush2.msra.mxu0 %v298
    %544 = vmatprep.subr.mxu0 0.0
    %545 = vmatpush2.msra.mxu0 %v297
    %546 = vmatprep.subr.mxu0 0.0
    %547 = vmatpush2.msra.mxu0 %v296
    %548 = vmatprep.subr.mxu0 0.0
    %549 = vmatpush2.msra.mxu0 %v295
    %550 = vmatprep.subr.mxu0 0.0
    %551 = vmatpush2.msra.mxu0 %v294
    %552 = vmatprep.mubr.f32.mxu0 %v392
    %553 = vmatmul.mubr.f32.gmra.mxu0 %v390
    %v554 = vpop.f32.mrf.mxu0
    %v555 = vadd.f32 %v485, %v554
    %v556 = vpop.f32.mrf.mxu0
    %557 = vdwg.mxu0
    %558 = vmatprep.subr.mxu0 0.0
    %559 = vmatpush1.msra.mxu0 %v325
    %560 = vmatprep.subr.mxu0 0.0
    %561 = vmatpush1.msra.mxu0 %v324
    %562 = vmatprep.subr.mxu0 0.0
    %563 = vmatpush1.msra.mxu0 %v323
    %564 = vmatprep.subr.mxu0 0.0
    %565 = vmatpush1.msra.mxu0 %v322
    %566 = vmatprep.subr.mxu0 0.0
    %567 = vmatpush1.msra.mxu0 %v321
    %568 = vmatprep.subr.mxu0 0.0
    %569 = vmatpush1.msra.mxu0 %v320
    %570 = vmatprep.subr.mxu0 0.0
    %571 = vmatpush1.msra.mxu0 %v319
    %572 = vmatprep.subr.mxu0 0.0
    %573 = vmatpush1.msra.mxu0 %v318
    %574 = vmatprep.subr.mxu0 0.0
    %575 = vmatpush1.msra.mxu0 %v317
    %576 = vmatprep.subr.mxu0 0.0
    %577 = vmatpush1.msra.mxu0 %v316
    %578 = vmatprep.subr.mxu0 0.0
    %579 = vmatpush1.msra.mxu0 %v315
    %580 = vmatprep.subr.mxu0 0.0
    %581 = vmatpush1.msra.mxu0 %v314
    %582 = vmatprep.subr.mxu0 0.0
    %583 = vmatpush1.msra.mxu0 %v313
    %584 = vmatprep.subr.mxu0 0.0
    %585 = vmatpush1.msra.mxu0 %v312
    %586 = vmatprep.subr.mxu0 0.0
    %587 = vmatpush1.msra.mxu0 %v311
    %588 = vmatprep.subr.mxu0 0.0
    %589 = vmatpush1.msra.mxu0 %v310
    %590 = vmatprep.subr.mxu0 0.0
    %591 = vmatpush2.msra.mxu0 %v341
    %592 = vmatprep.subr.mxu0 0.0
    %593 = vmatpush2.msra.mxu0 %v340
    %594 = vmatprep.subr.mxu0 0.0
    %595 = vmatpush2.msra.mxu0 %v339
    %596 = vmatprep.subr.mxu0 0.0
    %597 = vmatpush2.msra.mxu0 %v338
    %598 = vmatprep.subr.mxu0 0.0
    %599 = vmatpush2.msra.mxu0 %v337
    %600 = vmatprep.subr.mxu0 0.0
    %601 = vmatpush2.msra.mxu0 %v336
    %602 = vmatprep.subr.mxu0 0.0
    %603 = vmatpush2.msra.mxu0 %v335
    %604 = vmatprep.subr.mxu0 0.0
    %605 = vmatpush2.msra.mxu0 %v334
    %606 = vmatprep.subr.mxu0 0.0
    %607 = vmatpush2.msra.mxu0 %v333
    %608 = vmatprep.subr.mxu0 0.0
    %609 = vmatpush2.msra.mxu0 %v332
    %610 = vmatprep.subr.mxu0 0.0
    %611 = vmatpush2.msra.mxu0 %v331
    %612 = vmatprep.subr.mxu0 0.0
    %613 = vmatpush2.msra.mxu0 %v330
    %614 = vmatprep.subr.mxu0 0.0
    %615 = vmatpush2.msra.mxu0 %v329
    %616 = vmatprep.subr.mxu0 0.0
    %617 = vmatpush2.msra.mxu0 %v328
    %618 = vmatprep.subr.mxu0 0.0
    %619 = vmatpush2.msra.mxu0 %v327
    %620 = vmatprep.subr.mxu0 0.0
    %621 = vmatpush2.msra.mxu0 %v326
    %622 = vmatprep.mubr.f32.mxu0 %v408
    %623 = vmatmul.mubr.f32.gmra.mxu0 %v400
    %v624 = vpop.f32.mrf.mxu0
    %v625 = vadd.f32 %v555, %v624
    %v626 = vpop.f32.mrf.mxu0
    %627 = vdwg.mxu0
    %628 = vmatprep.subr.mxu0 0.0
    %629 = vmatpush1.msra.mxu0 %v357
    %630 = vmatprep.subr.mxu0 0.0
    %631 = vmatpush1.msra.mxu0 %v356
    %632 = vmatprep.subr.mxu0 0.0
    %633 = vmatpush1.msra.mxu0 %v355
    %634 = vmatprep.subr.mxu0 0.0
    %635 = vmatpush1.msra.mxu0 %v354
    %636 = vmatprep.subr.mxu0 0.0
    %637 = vmatpush1.msra.mxu0 %v353
    %638 = vmatprep.subr.mxu0 0.0
    %639 = vmatpush1.msra.mxu0 %v352
    %640 = vmatprep.subr.mxu0 0.0
    %641 = vmatpush1.msra.mxu0 %v351
    %642 = vmatprep.subr.mxu0 0.0
    %643 = vmatpush1.msra.mxu0 %v350
    %644 = vmatprep.subr.mxu0 0.0
    %645 = vmatpush1.msra.mxu0 %v349
    %646 = vmatprep.subr.mxu0 0.0
    %647 = vmatpush1.msra.mxu0 %v348
    %648 = vmatprep.subr.mxu0 0.0
    %649 = vmatpush1.msra.mxu0 %v347
    %650 = vmatprep.subr.mxu0 0.0
    %651 = vmatpush1.msra.mxu0 %v346
    %652 = vmatprep.subr.mxu0 0.0
    %653 = vmatpush1.msra.mxu0 %v345
    %654 = vmatprep.subr.mxu0 0.0
    %655 = vmatpush1.msra.mxu0 %v344
    %656 = vmatprep.subr.mxu0 0.0
    %657 = vmatpush1.msra.mxu0 %v343
    %658 = vmatprep.subr.mxu0 0.0
    %659 = vmatpush1.msra.mxu0 %v342
    %660 = vmatprep.subr.mxu0 0.0
    %661 = vmatpush2.msra.mxu0 %v373
    %662 = vmatprep.subr.mxu0 0.0
    %663 = vmatpush2.msra.mxu0 %v372
    %664 = vmatprep.subr.mxu0 0.0
    %665 = vmatpush2.msra.mxu0 %v371
    %666 = vmatprep.subr.mxu0 0.0
    %667 = vmatpush2.msra.mxu0 %v370
    %668 = vmatprep.subr.mxu0 0.0
    %669 = vmatpush2.msra.mxu0 %v369
    %670 = vmatprep.subr.mxu0 0.0
    %671 = vmatpush2.msra.mxu0 %v368
    %672 = vmatprep.subr.mxu0 0.0
    %673 = vmatpush2.msra.mxu0 %v367
    %674 = vmatprep.subr.mxu0 0.0
    %675 = vmatpush2.msra.mxu0 %v366
    %676 = vmatprep.subr.mxu0 0.0
    %677 = vmatpush2.msra.mxu0 %v365
    %678 = vmatprep.subr.mxu0 0.0
    %679 = vmatpush2.msra.mxu0 %v364
    %680 = vmatprep.subr.mxu0 0.0
    %681 = vmatpush2.msra.mxu0 %v363
    %682 = vmatprep.subr.mxu0 0.0
    %683 = vmatpush2.msra.mxu0 %v362
    %684 = vmatprep.subr.mxu0 0.0
    %685 = vmatpush2.msra.mxu0 %v361
    %686 = vmatprep.subr.mxu0 0.0
    %687 = vmatpush2.msra.mxu0 %v360
    %688 = vmatprep.subr.mxu0 0.0
    %689 = vmatpush2.msra.mxu0 %v359
    %690 = vmatprep.subr.mxu0 0.0
    %691 = vmatpush2.msra.mxu0 %v358
    %692 = vmatprep.mubr.f32.mxu0 %v409
    %693 = vmatmul.mubr.f32.gmra.mxu0 %v407
    %v694 = vpop.f32.mrf.mxu0
    %v695 = vadd.f32 %v625, %v694
    %v696 = vpop.f32.mrf.mxu0
    %697 = vdwg.mxu0
    %v698 = vadd.f32 %v245, %v695
    %699 = vst [vmem:[#allocation2] sm:$0x3] %v698
    // Predicated region
    $region54: #{tpu_custom_call.1} parent=1 // pred_check
      %p700 = pneg %p92
    $region55: #{tpu_custom_call.1} parent=1 // pred_check_branch
      %702 = sbr.rel (%p700) target = $region57
    $region56: #{tpu_custom_call.1} parent=1 // pred_region
      %v703 = vld [vmem:[#allocation2] sm:$0x3]
      %v704 = vld [vmem:[%s4] sm:$0x1]
      %v706 = vlaneseq
      %v707 = vshrl.u32 %v706, 7
      %v708 = vsub.s32 0, %v707
      %v709 = vrot.slane %v704, %v708
      %v711 = vadd.f32 %v703, %v709
      %v712 = vmax.f32 %v711, 0.0
      %v713 = vld [vmem:[#allocation11] sm:$0xff]
      %v714 = vld [vmem:[#allocation11 + $0x8] sm:$0xff]
      %v715 = vld [vmem:[#allocation11 + $0x10] sm:$0xff]
      %v716 = vld [vmem:[#allocation11 + $0x18] sm:$0xff]
      %v717 = vld [vmem:[#allocation11 + $0x20] sm:$0xff]
      %v718 = vld [vmem:[#allocation11 + $0x28] sm:$0xff]
      %v719 = vld [vmem:[#allocation11 + $0x30] sm:$0xff]
      %v720 = vld [vmem:[#allocation11 + $0x38] sm:$0xff]
      %v721 = vld [vmem:[#allocation11 + $0x40] sm:$0xff]
      %v722 = vld [vmem:[#allocation11 + $0x48] sm:$0xff]
      %v723 = vld [vmem:[#allocation11 + $0x50] sm:$0xff]
      %v724 = vld [vmem:[#allocation11 + $0x58] sm:$0xff]
      %v725 = vld [vmem:[#allocation11 + $0x60] sm:$0xff]
      %v726 = vld [vmem:[#allocation11 + $0x68] sm:$0xff]
      %v727 = vld [vmem:[#allocation11 + $0x70] sm:$0xff]
      %v728 = vld [vmem:[#allocation11 + $0x78] sm:$0xff]
      %v729 = vld [vmem:[%s6] sm:$0x1]
      %v731 = vlaneseq
      %v732 = vshrl.u32 %v731, 7
      %v733 = vsub.s32 0, %v732
      %v734 = vrot.slane %v729, %v733
      %736 = vmatprep.subr.mxu0 0.0
      %737 = vmatpush1.msra.mxu0 %v728
      %738 = vmatprep.subr.mxu0 0.0
      %739 = vmatpush1.msra.mxu0 %v727
      %740 = vmatprep.subr.mxu0 0.0
      %741 = vmatpush1.msra.mxu0 %v726
      %742 = vmatprep.subr.mxu0 0.0
      %743 = vmatpush1.msra.mxu0 %v725
      %744 = vmatprep.subr.mxu0 0.0
      %745 = vmatpush1.msra.mxu0 %v724
      %746 = vmatprep.subr.mxu0 0.0
      %747 = vmatpush1.msra.mxu0 %v723
      %748 = vmatprep.subr.mxu0 0.0
      %749 = vmatpush1.msra.mxu0 %v722
      %750 = vmatprep.subr.mxu0 0.0
      %751 = vmatpush1.msra.mxu0 %v721
      %752 = vmatprep.subr.mxu0 0.0
      %753 = vmatpush1.msra.mxu0 %v720
      %754 = vmatprep.subr.mxu0 0.0
      %755 = vmatpush1.msra.mxu0 %v719
      %756 = vmatprep.subr.mxu0 0.0
      %757 = vmatpush1.msra.mxu0 %v718
      %758 = vmatprep.subr.mxu0 0.0
      %759 = vmatpush1.msra.mxu0 %v717
      %760 = vmatprep.subr.mxu0 0.0
      %761 = vmatpush1.msra.mxu0 %v716
      %762 = vmatprep.subr.mxu0 0.0
      %763 = vmatpush1.msra.mxu0 %v715
      %764 = vmatprep.subr.mxu0 0.0
      %765 = vmatpush1.msra.mxu0 %v714
      %766 = vmatprep.subr.mxu0 0.0
      %767 = vmatpush1.msra.mxu0 %v713
      %768 = vmatprep.subr.mxu0 0.0
      %769 = vmatpush2.msra.mxu0 0.0
      %770 = vmatprep.subr.mxu0 0.0
      %771 = vmatpush2.msra.mxu0 0.0
      %772 = vmatprep.subr.mxu0 0.0
      %773 = vmatpush2.msra.mxu0 0.0
      %774 = vmatprep.subr.mxu0 0.0
      %775 = vmatpush2.msra.mxu0 0.0
      %776 = vmatprep.subr.mxu0 0.0
      %777 = vmatpush2.msra.mxu0 0.0
      %778 = vmatprep.subr.mxu0 0.0
      %779 = vmatpush2.msra.mxu0 0.0
      %780 = vmatprep.subr.mxu0 0.0
      %781 = vmatpush2.msra.mxu0 0.0
      %782 = vmatprep.subr.mxu0 0.0
      %783 = vmatpush2.msra.mxu0 0.0
      %784 = vmatprep.subr.mxu0 0.0
      %785 = vmatpush2.msra.mxu0 0.0
      %786 = vmatprep.subr.mxu0 0.0
      %787 = vmatpush2.msra.mxu0 0.0
      %788 = vmatprep.subr.mxu0 0.0
      %789 = vmatpush2.msra.mxu0 0.0
      %790 = vmatprep.subr.mxu0 0.0
      %791 = vmatpush2.msra.mxu0 0.0
      %792 = vmatprep.subr.mxu0 0.0
      %793 = vmatpush2.msra.mxu0 0.0
      %794 = vmatprep.subr.mxu0 0.0
      %795 = vmatpush2.msra.mxu0 0.0
      %796 = vmatprep.subr.mxu0 0.0
      %797 = vmatpush2.msra.mxu0 0.0
      %798 = vmatprep.subr.mxu0 0.0
      %799 = vmatpush2.msra.mxu0 0.0
      %800 = vmatprep.mubr.f32.mxu0 0.0
      %801 = vmatmul.mubr.f32.gmra.mxu0 %v712
      %v802 = vpop.f32.mrf.mxu0
      %v803 = vadd.f32 %v734, %v802
      %v804 = vpop.f32.mrf.mxu0
      %805 = vdwg.mxu0
      %806 = vst [vmem:[#allocation13] sm:$0x3] %v803
    $region57: #{tpu_custom_call.1} parent=1 // pred_fallthru
      _
    // Predicated region
    $region58: #{tpu_custom_call.1} parent=1 // pred_check
      _
    $region59: #{tpu_custom_call.1} parent=1 // pred_check_branch
      %808 = sbr.rel (0) target = $region61
    $region60: #{tpu_custom_call.1} parent=1 // pred_region
      %s810 = ssub.s32 256, 256
      %811 = vsyncadd [#allocation5], %s810
      %s813 = sshll.u32 [#allocation12], 4
      %s814 = int_to_ptr.vmem [resolvable:$true] %s813
      %816 = dma.vmem_to_hbm [thread:$0]  %s814, 256, %s7, [#allocation5]
    $region61: #{tpu_custom_call.1} parent=1 // pred_fallthru
      _
    // Predicated region
    $region62: #{tpu_custom_call.1} parent=1 // pred_check
      _
    $region63: #{tpu_custom_call.1} parent=1 // pred_check_branch
      %818 = sbr.rel (0) target = $region65
    $region64: #{tpu_custom_call.1} parent=1 // pred_region
      %s820 = ssub.s32 32, 32
      %821 = vsyncadd [#allocation14], %s820
      %s823 = sshll.u32 [#allocation13], 4
      %s824 = int_to_ptr.vmem [resolvable:$true] %s823
      %826 = dma.vmem_to_hbm [thread:$0]  %s824, 32, %s8, [#allocation14]
    $region65: #{tpu_custom_call.1} parent=1 // pred_fallthru
      _
    // Predicated region
    $region66: #{tpu_custom_call.1} parent=1 // pred_check
      _
    $region67: #{tpu_custom_call.1} parent=1 // pred_check_branch
      %828 = sbr.rel (0) target = $region69
    $region68: #{tpu_custom_call.1} parent=1 // pred_region
      %829 = dma.done [#allocation5], 256
    $region69: #{tpu_custom_call.1} parent=1 // pred_fallthru
      _
    // Predicated region
    $region70: #{tpu_custom_call.1} parent=1 // pred_check
      _
    $region71: #{tpu_custom_call.1} parent=1 // pred_check_branch
      %831 = sbr.rel (0) target = $region73
    $region72: #{tpu_custom_call.1} parent=1 // pred_region
      %832 = dma.done [#allocation14], 32
    $region73: #{tpu_custom_call.1} parent=1 // pred_fallthru
      _
    %833 = vsyncpa [#allocation4], 1
    %834 = vsyncpa [#allocation7], 1
    %835 = vsyncpa [#allocation10], 1
    %836 = vsyncpa [#allocation5], 1
    %837 = vsyncpa [#allocation14], 1

</llo_original>
